<compile_context>
chip_gen: v5e
topology: v5e:2x2
jax: 0.10.0
libtpu: 0.0.40
codegen_flags: <defaults>
</compile_context>

<pallas_src>
from functools import partial

import jax
import jax.numpy as jnp
from jax.experimental import pallas as pl
from jax.experimental.pallas import tpu as pltpu


# ----------------------------- GELU flavors -----------------------------

def _gelu_exact(h):
    # nn.GELU() default: 0.5 * h * (1 + erf(h / sqrt(2))).
    # Mosaic has no hardware erf -> Abramowitz & Stegun 7.1.26 rational approx
    # (max abs err ~1.5e-7), built from ops that lower on TPU.
    a1, a2, a3, a4, a5 = 0.254829592, -0.284496736, 1.421413741, -1.453152027, 1.061405429
    p = 0.3275911
    z = h * 0.7071067811865476
    s = jnp.sign(z)
    az = jnp.abs(z)
    t = 1.0 / (1.0 + p * az)
    poly = ((((a5 * t + a4) * t + a3) * t + a2) * t + a1) * t
    erf_z = s * (1.0 - poly * jnp.exp(-az * az))
    return 0.5 * h * (1.0 + erf_z)


def _gelu_tanh(h):
    # tanh-GELU: one EUP tanh + a few VPU ops (recommended by perf review;
    # epilogue runs once per dst tile so this mostly matters on v5e).
    return jax.nn.gelu(h, approximate=True)


# ----------------------------- tiling helper -----------------------------

def _choose_tiles(n, tm_target=256, tk_target=1024):
    """Pick (tm, tk, n_pad).  tm/tk are powers of two, tm | tk | n_pad.

    * dst tile tm: capped so the 'parallel' grid axis keeps >= 2 tiles whenever
      the graph allows it (v7x has 2 TensorCores); floored at 128 rows.
    * reduction tile tk: as large as the graph allows, up to tk_target -- big
      k-tiles push the dominant A_T stream toward the HBM/DMA roofline and cut
      the ~0.35 us per-grid-step overhead.
    """
    assert tm_target & (tm_target - 1) == 0 and tm_target >= 128
    assert tk_target & (tk_target - 1) == 0 and tk_target >= 128
    tm = max(128, min(tm_target, pl.next_power_of_2(max(n // 2, 1))))
    tk = max(tm, min(tk_target, pl.next_power_of_2(n)))
    n_pad = pl.cdiv(n, tk) * tk          # tk is a multiple of tm => tm | n_pad
    return tm, tk, n_pad


# ----------------------------- kernel -----------------------------

def gcn_kernel(a_t_ref, xs_ref, inv_dst_ref, w1_ref, b1_ref, w2_ref, b2_ref,
               o_ref, acc_ref, *, tk, gelu_fn):
    k = pl.program_id(1)

    @pl.when(k == 0)
    def _init():
        acc_ref[...] = jnp.zeros_like(acc_ref)

    # Aggregation hot loop: agg[v, :] += sum_u A_T[v, u] * xs[u, :]
    # A_T tile is the only per-step HBM stream; xs is VMEM-resident, so just
    # slice the current source tile out of it (aligned dynamic start).
    src0 = pl.multiple_of(k * tk, tk)
    xs_tile = xs_ref[pl.ds(src0, tk), :]                       # (tk, Dp) bf16
    acc_ref[...] += jnp.dot(a_t_ref[...], xs_tile,
                            preferred_element_type=jnp.float32)

    @pl.when(k == pl.num_programs(1) - 1)
    def _epilogue():
        # Destination-side normalization (f32 VPU), then FeedForwardModule.
        # dropout_1 / dropout_2 are identity in eval mode.
        agg = acc_ref[...] * inv_dst_ref[...]                  # (tm, Dp) f32
        # bf16 MXU operands, f32 accumulation (multi-pass f32 matmul avoided).
        h = jnp.dot(agg.astype(jnp.bfloat16), w1_ref[...],
                    preferred_element_type=jnp.float32) + b1_ref[...]
        h = gelu_fn(h)                                         # f32 VPU/EUP
        out = jnp.dot(h.astype(jnp.bfloat16), w2_ref[...],
                      preferred_element_type=jnp.float32) + b2_ref[...]
        o_ref[...] = out.astype(o_ref.dtype)
    # TODO(synk): dropout omitted (inference); add pltpu PRNG masks for training.


# ----------------------------- wrappers -----------------------------

def prepare_graph(adjacency, *, tm=256, tk=1024):
    """One-time per-graph preprocessing; reuse the result across layers/calls.

    Returns (a_t, inv_sqrt_deg):
      a_t          : (n_pad, n_pad) bf16, dst-major (transposed) padded adjacency
      inv_sqrt_deg : (n_pad,) f32, 1/sqrt(out_degree) (1.0 in padded rows)
    Doing this once amortizes the transpose/pad/cast traffic that would
    otherwise be repaid on every layer of a multi-layer GCN.
    """
    n = adjacency.shape[0]
    _, _, n_pad = _choose_tiles(n, tm, tk)
    deg = jnp.maximum(adjacency.sum(axis=1), 1.0)     # guard zero out-degree nodes
    inv_sqrt = jax.lax.rsqrt(deg)                     # (N,)
    # A stored transposed (dst-major), bf16 (exact for a 0/1 adjacency).
    # TODO(synk): generation-specific dtype (int8 on v5e/v6e, fp8 e4m3 on v7x)
    # would halve this stream further; needs re-validation vs reference_mixed.
    a_t = jnp.zeros((n_pad, n_pad), jnp.bfloat16).at[:n, :n].set(
        adjacency.T.astype(jnp.bfloat16))
    inv_pad = jnp.ones((n_pad,), jnp.float32).at[:n].set(inv_sqrt)
    return a_t, inv_pad


def gcn_forward(a_t, inv_sqrt_deg, x, w1, b1, w2, b2, *,
                tm=256, tk=1024, exact_gelu=False):
    n, dim = x.shape
    hidden = w1.shape[1]
    tm, tk, n_pad = _choose_tiles(n, tm, tk)
    assert a_t.shape == (n_pad, n_pad), "prepare_graph/tile settings mismatch"

    d_pad = pl.cdiv(dim, 128) * 128
    h_pad = pl.cdiv(hidden, 128) * 128

    # Source-side normalization hoisted (computed once), features padded to
    # 128 lanes so every matmul / the output store is lane-dense.
    xs_p = jnp.zeros((n_pad, d_pad), jnp.bfloat16).at[:n, :dim].set(
        (x * inv_sqrt_deg[:n, None]).astype(jnp.bfloat16))
    inv_dst = inv_sqrt_deg[:, None]                                  # (n_pad, 1) f32

    # FF weights padded & stored bf16 (MXU operands); biases stay f32.
    w1_p = jnp.zeros((d_pad, h_pad), jnp.bfloat16).at[:dim, :hidden].set(
        w1.astype(jnp.bfloat16))
    b1_p = jnp.zeros((1, h_pad), jnp.float32).at[0, :hidden].set(b1)
    w2_p = jnp.zeros((h_pad, d_pad), jnp.bfloat16).at[:hidden, :dim].set(
        w2.astype(jnp.bfloat16))
    b2_p = jnp.zeros((1, d_pad), jnp.float32).at[0, :dim].set(b2)

    nm = n_pad // tm     # dst tiles   ("parallel"  -> split across v7x TCs)
    nk = n_pad // tk     # src tiles   ("arbitrary" -> reduction, innermost)

    # VMEM footprint (conservative: inputs counted double-buffered) -> limit.
    footprint = (
        2 * n_pad * d_pad * 2            # resident xs
        + 2 * tm * tk * 2                # A_T tile stream
        + 2 * (d_pad * h_pad + h_pad * d_pad) * 2   # bf16 weights
        + 2 * (h_pad + d_pad) * 4        # biases
        + 2 * tm * 4                     # inv_dst
        + tm * d_pad * 4                 # f32 accumulator scratch
        + 2 * tm * d_pad * 4             # output tile
    )
    vmem_limit = int(min(max(32 * 1024 * 1024, 1.5 * footprint),
                         48 * 1024 * 1024))   # <= 48 MiB: safe on v7x (64 MiB phys)

    cost = pl.CostEstimate(
        flops=2 * n_pad * n_pad * d_pad
              + 2 * n_pad * d_pad * h_pad
              + 2 * n_pad * h_pad * d_pad,
        transcendentals=n_pad * h_pad,
        bytes_accessed=a_t.size * 2 + xs_p.size * 2
                       + (w1_p.size + w2_p.size) * 2
                       + (b1_p.size + b2_p.size) * 4
                       + n_pad * d_pad * 4 + n_pad * 4,
    )

    gelu_fn = _gelu_exact if exact_gelu else _gelu_tanh
    kernel = partial(gcn_kernel, tk=tk, gelu_fn=gelu_fn)

    out_pad = pl.pallas_call(
        kernel,
        out_shape=jax.ShapeDtypeStruct((n_pad, d_pad), x.dtype),
        grid_spec=pltpu.PrefetchScalarGridSpec(
            num_scalar_prefetch=0,
            grid=(nm, nk),
            in_specs=[
                # A_T tile (dst block i, src block k): the only per-step HBM stream.
                # TODO(synk): sweep pipeline_mode=pl.Buffered(3) here if profiling
                # shows exposed DMA at tile boundaries.
                pl.BlockSpec((tm, tk), lambda i, k: (i, k)),
                # xs: whole padded feature matrix, VMEM-resident (constant index).
                pl.BlockSpec((n_pad, d_pad), lambda i, k: (0, 0)),
                # dst-side 1/sqrt(deg): per dst tile.
                pl.BlockSpec((tm, 1), lambda i, k: (i, 0)),
                # FF weights / biases resident across the whole grid.
                pl.BlockSpec((d_pad, h_pad), lambda i, k: (0, 0)),
                pl.BlockSpec((1, h_pad), lambda i, k: (0, 0)),
                pl.BlockSpec((h_pad, d_pad), lambda i, k: (0, 0)),
                pl.BlockSpec((1, d_pad), lambda i, k: (0, 0)),
            ],
            out_specs=pl.BlockSpec((tm, d_pad), lambda i, k: (i, 0)),
            scratch_shapes=[pltpu.VMEM((tm, d_pad), jnp.float32)],
        ),
        compiler_params=pltpu.CompilerParams(
            dimension_semantics=("parallel", "arbitrary"),
            vmem_limit_bytes=vmem_limit,
        ),
        cost_estimate=cost,
    )(a_t, xs_p, inv_dst, w1_p, b1_p, w2_p, b2_p)

    return out_pad[:n, :dim]


def gcn_module(adjacency, x, w1, b1, w2, b2, *, tm=256, tk=1024, exact_gelu=False):
    """Convenience: prepare + forward.  For multi-layer models call
    prepare_graph once and reuse its outputs with gcn_forward."""
    a_t, inv = prepare_graph(adjacency, tm=tm, tk=tk)
    return gcn_forward(a_t, inv, x, w1, b1, w2, b2,
                       tm=tm, tk=tk, exact_gelu=exact_gelu)


# ---------------------------- references ----------------------------

def reference_f32(adjacency, x, w1, b1, w2, b2):
    # Pure-f32 exact-GELU reference (matches the PyTorch module in eval mode).
    deg = jnp.maximum(adjacency.sum(axis=1), 1.0)
    inv = jax.lax.rsqrt(deg)
    xs = x * inv[:, None]
    agg = (adjacency.T @ xs) * inv[:, None]
    h = agg @ w1 + b1
    h = 0.5 * h * (1.0 + jax.scipy.special.erf(h / jnp.sqrt(2.0)))
    return h @ w2 + b2


def reference_mixed(adjacency, x, w1, b1, w2, b2):
    # Same math with the kernel's mixed precision: bf16 MXU operands everywhere,
    # f32 accumulation, f32 biases/scaling, tanh-GELU.
    deg = jnp.maximum(adjacency.sum(axis=1), 1.0)
    inv = jax.lax.rsqrt(deg)
    xs = (x * inv[:, None]).astype(jnp.bfloat16)
    a_t = adjacency.T.astype(jnp.bfloat16)
    agg = jnp.dot(a_t, xs, preferred_element_type=jnp.float32) * inv[:, None]
    h = jnp.dot(agg.astype(jnp.bfloat16), w1.astype(jnp.bfloat16),
                preferred_element_type=jnp.float32) + b1
    h = jax.nn.gelu(h, approximate=True)
    return jnp.dot(h.astype(jnp.bfloat16), w2.astype(jnp.bfloat16),
                   preferred_element_type=jnp.float32) + b2


if __name__ == "__main__":
    N = 512                     # number of nodes
    DIM = 32                    # dim
    HIDDEN_MULT = 2             # hidden_dim_multiplier
    HIDDEN = DIM * HIDDEN_MULT  # hidden_dim
    # dropout p=0.2 in __init__, identity at inference.

    key = jax.random.PRNGKey(0)
    k_adj, k_x, k_w1, k_b1, k_w2, k_b2 = jax.random.split(key, 6)

    # Random directed graph + self loops (guarantees out-degree >= 1).
    adj = jax.random.bernoulli(k_adj, 0.15, (N, N)).astype(jnp.float32)
    adj = jnp.maximum(adj, jnp.eye(N, dtype=jnp.float32))

    x = jax.random.normal(k_x, (N, DIM), dtype=jnp.float32)

    # Deterministic nn.Linear-style init: U(-1/sqrt(fan_in), 1/sqrt(fan_in)).
    bound1 = 1.0 / jnp.sqrt(DIM)
    w1 = jax.random.uniform(k_w1, (DIM, HIDDEN), jnp.float32, -bound1, bound1)
    b1 = jax.random.uniform(k_b1, (HIDDEN,), jnp.float32, -bound1, bound1)
    bound2 = 1.0 / jnp.sqrt(HIDDEN)
    w2 = jax.random.uniform(k_w2, (HIDDEN, DIM), jnp.float32, -bound2, bound2)
    b2 = jax.random.uniform(k_b2, (DIM,), jnp.float32, -bound2, bound2)

    # Preferred usage: prepare the graph once, reuse across layers/calls.
    a_t, inv_sqrt = prepare_graph(adj)
    out = gcn_forward(a_t, inv_sqrt, x, w1, b1, w2, b2)
    out = jax.block_until_ready(out)
    assert out.shape == (N, DIM)

    # Tight check against a reference with identical mixed precision + tanh-GELU.
    ref_m = reference_mixed(adj, x, w1, b1, w2, b2)
    assert jnp.allclose(out, ref_m, atol=2e-4, rtol=2e-4), \
        "mismatch vs mixed-precision reference"

    # Loose check against the pure-f32 erf-GELU module semantics
    # (covers bf16 MXU feed + tanh-GELU approximation error).
    ref_f = reference_f32(adj, x, w1, b1, w2, b2)
    assert jnp.allclose(out, ref_f, atol=2e-2, rtol=2e-2), \
        "mismatch vs f32 reference"

    print("KERNEL_OK")
</pallas_src>

<mosaic_0001>
module attributes {stable_mosaic.version = 11 : i64} {
  func.func @gcn_kernel(%arg0: i32, %arg1: i32, %arg2: memref<256x512xbf16, #tpu.memory_space<vmem>>, %arg3: memref<512x128xbf16, #tpu.memory_space<vmem>>, %arg4: memref<256x1xf32, #tpu.memory_space<vmem>>, %arg5: memref<128x128xbf16, #tpu.memory_space<vmem>>, %arg6: memref<1x128xf32, #tpu.memory_space<vmem>>, %arg7: memref<128x128xbf16, #tpu.memory_space<vmem>>, %arg8: memref<1x128xf32, #tpu.memory_space<vmem>>, %arg9: memref<256x128xf32, #tpu.memory_space<vmem>>, %arg10: memref<256x128xf32, #tpu.memory_space<vmem>>) attributes {dimension_semantics = [#tpu.dimension_semantics<parallel>, #tpu.dimension_semantics<arbitrary>], iteration_bounds = array<i64: 2, 1>, scalar_prefetch = 0 : i64, scratch_operands = 1 : i64, tpu.core_type = #tpu.core_type<tc>, window_params = [{transform_indices = @transform_0, window_bounds = array<i64: 256, 512>}, {pipeline_mode = #tpu.pipeline_mode<synchronous>, transform_indices = @transform_1, window_bounds = array<i64: 512, 128>}, {transform_indices = @transform_2, window_bounds = array<i64: 256, 1>}, {pipeline_mode = #tpu.pipeline_mode<synchronous>, transform_indices = @transform_3, window_bounds = array<i64: 128, 128>}, {pipeline_mode = #tpu.pipeline_mode<synchronous>, transform_indices = @transform_4, window_bounds = array<i64: 1, 128>}, {pipeline_mode = #tpu.pipeline_mode<synchronous>, transform_indices = @transform_5, window_bounds = array<i64: 128, 128>}, {pipeline_mode = #tpu.pipeline_mode<synchronous>, transform_indices = @transform_6, window_bounds = array<i64: 1, 128>}, {transform_indices = @transform_7, window_bounds = array<i64: 256, 128>}]} {
    %c0_i32 = arith.constant 0 : i32
    %0 = arith.cmpi eq, %arg1, %c0_i32 : i32
    %1 = arith.extui %0 : i1 to i32
    %c0_i32_0 = arith.constant 0 : i32
    %2 = arith.cmpi ne, %1, %c0_i32_0 : i32
    scf.if %2 {
      %cst_9 = arith.constant 0.000000e+00 : f32
      %15 = vector.broadcast %cst_9 : f32 to vector<256x128xf32>
      %c0_10 = arith.constant 0 : index
      %c0_11 = arith.constant 0 : index
      %16 = vector.load %arg10[%c0_10, %c0_11] : memref<256x128xf32, #tpu.memory_space<vmem>>, vector<256x128xf32>
      tpu.vector_store %arg10[%c0_10, %c0_11], %15 {strides = array<i32>} : memref<256x128xf32, #tpu.memory_space<vmem>>, vector<256x128xf32>,
    } else {
    }
    %c512_i32 = arith.constant 512 : i32
    %3 = arith.muli %arg1, %c512_i32 : i32
    %4 = tpu.assume_multiple %3, 512 : i32
    %5 = arith.index_cast %4 : i32 to index
    %c0 = arith.constant 0 : index
    %6 = vector.load %arg3[%5, %c0] : memref<512x128xbf16, #tpu.memory_space<vmem>>, vector<512x128xbf16>
    %c0_1 = arith.constant 0 : index
    %c0_2 = arith.constant 0 : index
    %7 = vector.load %arg10[%c0_1, %c0_2] : memref<256x128xf32, #tpu.memory_space<vmem>>, vector<256x128xf32>
    %c0_3 = arith.constant 0 : index
    %c0_4 = arith.constant 0 : index
    %8 = vector.load %arg2[%c0_3, %c0_4] : memref<256x512xbf16, #tpu.memory_space<vmem>>, vector<256x512xbf16>
    %cst = arith.constant dense<0.000000e+00> : vector<256x128xf32>
    %9 = tpu.matmul %8, %6, %cst {dimension_numbers = #tpu.dot_dimension_numbers<[1], [0], [0], [1], [0, 0, 1, 1], [], []>} : vector<256x512xbf16>, vector<512x128xbf16>, vector<256x128xf32> -> vector<256x128xf32>
    %10 = arith.addf %7, %9 : vector<256x128xf32>
    %c0_5 = arith.constant 0 : index
    %c0_6 = arith.constant 0 : index
    %11 = vector.load %arg10[%c0_5, %c0_6] : memref<256x128xf32, #tpu.memory_space<vmem>>, vector<256x128xf32>
    tpu.vector_store %arg10[%c0_5, %c0_6], %10 {strides = array<i32>} : memref<256x128xf32, #tpu.memory_space<vmem>>, vector<256x128xf32>,
    %c0_i32_7 = arith.constant 0 : i32
    %12 = arith.cmpi eq, %arg1, %c0_i32_7 : i32
    %13 = arith.extui %12 : i1 to i32
    %c0_i32_8 = arith.constant 0 : i32
    %14 = arith.cmpi ne, %13, %c0_i32_8 : i32
    scf.if %14 {
      %c0_9 = arith.constant 0 : index
      %c0_10 = arith.constant 0 : index
      %15 = vector.load %arg10[%c0_9, %c0_10] : memref<256x128xf32, #tpu.memory_space<vmem>>, vector<256x128xf32>
      %c0_11 = arith.constant 0 : index
      %c0_12 = arith.constant 0 : index
      %16 = vector.load %arg4[%c0_11, %c0_12] : memref<256x1xf32, #tpu.memory_space<vmem>>, vector<256x1xf32>
      %17 = vector.broadcast %16 : vector<256x1xf32> to vector<256x128xf32>
      %18 = arith.mulf %15, %17 : vector<256x128xf32>
      %19 = arith.truncf %18 : vector<256x128xf32> to vector<256x128xbf16>
      %c0_13 = arith.constant 0 : index
      %c0_14 = arith.constant 0 : index
      %20 = vector.load %arg5[%c0_13, %c0_14] : memref<128x128xbf16, #tpu.memory_space<vmem>>, vector<128x128xbf16>
      %cst_15 = arith.constant dense<0.000000e+00> : vector<256x128xf32>
      %21 = tpu.matmul %19, %20, %cst_15 {dimension_numbers = #tpu.dot_dimension_numbers<[1], [0], [0], [1], [0, 0, 1, 1], [], []>} : vector<256x128xbf16>, vector<128x128xbf16>, vector<256x128xf32> -> vector<256x128xf32>
      %c0_16 = arith.constant 0 : index
      %c0_17 = arith.constant 0 : index
      %22 = vector.load %arg6[%c0_16, %c0_17] : memref<1x128xf32, #tpu.memory_space<vmem>>, vector<1x128xf32>
      %23 = vector.broadcast %22 : vector<1x128xf32> to vector<256x128xf32>
      %24 = arith.addf %21, %23 : vector<256x128xf32>
      %25 = arith.mulf %24, %24 : vector<256x128xf32>
      %26 = arith.mulf %24, %25 : vector<256x128xf32>
      %cst_18 = arith.constant 4.471500e-02 : f32
      %27 = vector.broadcast %cst_18 : f32 to vector<256x128xf32>
      %28 = arith.mulf %27, %26 : vector<256x128xf32>
      %29 = arith.addf %24, %28 : vector<256x128xf32>
      %cst_19 = arith.constant 0.797884583 : f32
      %30 = vector.broadcast %cst_19 : f32 to vector<256x128xf32>
      %31 = arith.mulf %30, %29 : vector<256x128xf32>
      %32 = math.tanh %31 : vector<256x128xf32>
      %cst_20 = arith.constant 1.000000e+00 : f32
      %33 = vector.broadcast %cst_20 : f32 to vector<256x128xf32>
      %34 = arith.addf %33, %32 : vector<256x128xf32>
      %cst_21 = arith.constant 5.000000e-01 : f32
      %35 = vector.broadcast %cst_21 : f32 to vector<256x128xf32>
      %36 = arith.mulf %35, %34 : vector<256x128xf32>
      %37 = arith.mulf %24, %36 : vector<256x128xf32>
      %38 = arith.truncf %37 : vector<256x128xf32> to vector<256x128xbf16>
      %c0_22 = arith.constant 0 : index
      %c0_23 = arith.constant 0 : index
      %39 = vector.load %arg7[%c0_22, %c0_23] : memref<128x128xbf16, #tpu.memory_space<vmem>>, vector<128x128xbf16>
      %cst_24 = arith.constant dense<0.000000e+00> : vector<256x128xf32>
      %40 = tpu.matmul %38, %39, %cst_24 {dimension_numbers = #tpu.dot_dimension_numbers<[1], [0], [0], [1], [0, 0, 1, 1], [], []>} : vector<256x128xbf16>, vector<128x128xbf16>, vector<256x128xf32> -> vector<256x128xf32>
      %c0_25 = arith.constant 0 : index
      %c0_26 = arith.constant 0 : index
      %41 = vector.load %arg8[%c0_25, %c0_26] : memref<1x128xf32, #tpu.memory_space<vmem>>, vector<1x128xf32>
      %42 = vector.broadcast %41 : vector<1x128xf32> to vector<256x128xf32>
      %43 = arith.addf %40, %42 : vector<256x128xf32>
      %c0_27 = arith.constant 0 : index
      %c0_28 = arith.constant 0 : index
      %44 = vector.load %arg9[%c0_27, %c0_28] : memref<256x128xf32, #tpu.memory_space<vmem>>, vector<256x128xf32>
      tpu.vector_store %arg9[%c0_27, %c0_28], %43 {strides = array<i32>} : memref<256x128xf32, #tpu.memory_space<vmem>>, vector<256x128xf32>,
    } else {
    }
    return
  }
  func.func @transform_0(%arg0: i32, %arg1: i32) -> (i32, i32) {
    %c0_i32 = arith.constant 0 : i32
    return %arg0, %arg1 : i32, i32
  }
  func.func @transform_1(%arg0: i32, %arg1: i32) -> (i32, i32) {
    %c0_i32 = arith.constant 0 : i32
    %c0_i32_0 = arith.constant 0 : i32
    %c0_i32_1 = arith.constant 0 : i32
    return %c0_i32, %c0_i32_0 : i32, i32
  }
  func.func @transform_2(%arg0: i32, %arg1: i32) -> (i32, i32) {
    %c0_i32 = arith.constant 0 : i32
    %c0_i32_0 = arith.constant 0 : i32
    return %arg0, %c0_i32 : i32, i32
  }
  func.func @transform_3(%arg0: i32, %arg1: i32) -> (i32, i32) {
    %c0_i32 = arith.constant 0 : i32
    %c0_i32_0 = arith.constant 0 : i32
    %c0_i32_1 = arith.constant 0 : i32
    return %c0_i32, %c0_i32_0 : i32, i32
  }
  func.func @transform_4(%arg0: i32, %arg1: i32) -> (i32, i32) {
    %c0_i32 = arith.constant 0 : i32
    %c0_i32_0 = arith.constant 0 : i32
    %c0_i32_1 = arith.constant 0 : i32
    return %c0_i32, %c0_i32_0 : i32, i32
  }
  func.func @transform_5(%arg0: i32, %arg1: i32) -> (i32, i32) {
    %c0_i32 = arith.constant 0 : i32
    %c0_i32_0 = arith.constant 0 : i32
    %c0_i32_1 = arith.constant 0 : i32
    return %c0_i32, %c0_i32_0 : i32, i32
  }
  func.func @transform_6(%arg0: i32, %arg1: i32) -> (i32, i32) {
    %c0_i32 = arith.constant 0 : i32
    %c0_i32_0 = arith.constant 0 : i32
    %c0_i32_1 = arith.constant 0 : i32
    return %c0_i32, %c0_i32_0 : i32, i32
  }
  func.func @transform_7(%arg0: i32, %arg1: i32) -> (i32, i32) {
    %c0_i32 = arith.constant 0 : i32
    %c0_i32_0 = arith.constant 0 : i32
    return %arg0, %c0_i32 : i32, i32
  }
}

</mosaic_0001>

<llo_original>
// kernel: tpu_custom_call.1
$region0: #{tpu_custom_call.1}
  #allocation0 [shape = 'u32[]', space=smem, size = 0x4, offset = 0x4, fixed_abs, tag = 'smem constant byte address 0x4 - core index']
  #allocation1 [shape = 'u32[72,128]{1,0:T(1,128)}', space=vmem, size = 0x9000, scoped, tag = 'internal scratch']
  #allocation2 [shape = 'f32[256,128]{1,0:T(8,128)}', space=vmem, size = 0x20000, scoped, tag = 'scratch operand']
  %s0 = inlined_call_operand.hbm [shape: bf16[512,512], index: 0, kind: input, shape index: {}]
  %s1 = inlined_call_operand.vmem [shape: bf16[512,128], index: 1, kind: input, shape index: {}]
  %s2 = inlined_call_operand.vmem [shape: f32[512,1], index: 2, kind: input, shape index: {}]
  %s3 = inlined_call_operand.vmem [shape: bf16[128,128], index: 3, kind: input, shape index: {}]
  %s4 = inlined_call_operand.vmem [shape: f32[1,128], index: 4, kind: input, shape index: {}]
  %s5 = inlined_call_operand.vmem [shape: bf16[128,128], index: 5, kind: input, shape index: {}]
  %s6 = inlined_call_operand.vmem [shape: f32[1,128], index: 6, kind: input, shape index: {}]
  %s7 = inlined_call_operand.hbm [shape: f32[512,128], index: 7, kind: output, shape index: {}]
  %s8 = sld [smem:[#allocation0]]
  $region73: #{tpu_custom_call.1} parent=0
    _
  %s10 = ssub.s32 1, %s8
  %s11 = scalar_select 0, %s10, %s8
  $region1: #{tpu_custom_call.1} parent=0
    #allocation3 [shape = 'u8[524288]{0}', space=vmem, size = 0x80000, scoped, tag = 'input window, operand 0']
    #allocation4 [shape = 's32[2]{0}', space=sflag, size = 0x8, scoped, tag = 'scoped memory for tpu_custom_call.1']
    #allocation5 [shape = 's32[2]{0}', space=sflag, size = 0x8, scoped, tag = 'scoped memory for tpu_custom_call.1']
    #allocation6 [shape = 'u8[262144]{0}', space=vmem, size = 0x40000, scoped, tag = 'output window, operand 0']
    %12 = vsyncpa [#allocation4], 0
    %s13 = scalar_lea.sflag [#allocation4], 1
    %14 = vsyncpa %s13, 0
    %15 = vsyncpa [#allocation5], 0
    %s16 = scalar_lea.sflag [#allocation5], 1
    %17 = vsyncpa %s16, 0
    loop: start=0, step=1, limit=4
    $region2: #{tpu_custom_call.1} parent=1 // loop_pre_header
      _
    $region3: #{tpu_custom_call.1} parent=1 // loop_header
      %s19 = sphi 0, %s23
      %p20 = scmp.ge.s32.totalorder %s19, 4
      %s26 = sphi 0, %s38
      %s27 = sphi 0, %s34
      %s28 = sphi 0, %s26
      %s29 = sphi 0, %s27
      %s30 = sphi 0, %s28
      %s31 = sphi 0, %s29
      %s43 = sphi 0, %s45
      %s46 = sphi 0, %s43
      %s47 = sphi 0, %s46
      %s63 = sphi 0, %s47
      %s67 = sphi 0, %s67
      %s69 = sphi 0, %s67
      %s70 = sphi 0, %s69
      %s84 = sphi 0, %s70
      %s90 = sphi 0, %s92
      %s93 = sphi 0, %s90
      %s94 = sphi 0, %s93
      %s110 = sphi 0, %s94
      %s114 = sphi 0, %s114
      %s116 = sphi 0, %s114
      %s117 = sphi 0, %s116
      %s131 = sphi 0, %s117
      %s135 = sphi 0, %s135
      %s137 = sphi 0, %s135
      %s138 = sphi 0, %s137
      %s152 = sphi 0, %s138
      %s156 = sphi 0, %s156
      %s158 = sphi 0, %s156
      %s159 = sphi 0, %s158
      %s173 = sphi 0, %s159
      %s177 = sphi 0, %s177
      %s179 = sphi 0, %s177
      %s180 = sphi 0, %s179
      %s194 = sphi 0, %s180
      %s200 = sphi 0, %s202
      %s203 = sphi 0, %s200
      %s204 = sphi 0, %s203
      %s220 = sphi 0, %s204
    $region4: #{tpu_custom_call.1} parent=1 // loop_header_branch
      %22 = sbr.rel (%p20) target = $region8
    $region5: #{tpu_custom_call.1} parent=1 // loop_body
      %s24 = ssub.s32 %s19, 1
      %s25 = ssub.s32 %s19, 2
      %s32 = sadd.s32 1, %s27
      %p33 = scmp.ge.s32.totalorder %s32, 1
      %s34 = scalar_select %p33, 0, %s32
      %s35 = sadd.s32 1, %s26
      %s36 = scalar_select %p33, %s35, %s26
      %p37 = scmp.ge.s32.totalorder %s36, 2
      %s38 = scalar_select %p37, 0, %s36
      %s39 = ssub.s32 %s26, %s38
      %s40 = ssub.s32 %s27, %s34
      %s41 = sor.u32 %s39, %s40
      %p42 = scmp.eq.s32.totalorder %s41, 0
      %s44 = sadd.s32 %s43, 1
      %s45 = scalar_select %p42, %s43, %s44
      %p48 = pneg %p42
      %p49 = scmp.eq.s32.totalorder %s19, 1
      %p50 = por %p48, %p49
      %p51 = scmp.ne.s32.totalorder %s43, %s46
      %p52 = scmp.eq.s32.totalorder %s19, 0
      %p53 = por %p51, %p52
      %p54 = scmp.ne.s32.totalorder %s43, %s46
      %p55 = scmp.eq.s32.totalorder %s24, 1
      %p56 = por %p54, %p55
      %p57 = scmp.ne.s32.totalorder %s46, %s47
      %p58 = scmp.eq.s32.totalorder %s24, 0
      %p59 = por %p57, %p58
      %p60 = scmp.ne.s32.totalorder %s46, %s47
      %p61 = scmp.eq.s32.totalorder %s25, 1
      %p62 = por %p60, %p61
      %p64 = scmp.ne.s32.totalorder %s47, %s63
      %p65 = scmp.eq.s32.totalorder %s25, 0
      %p66 = por %p64, %p65
      %s68 = sadd.s32 %s67, 1
      %p71 = scmp.eq.s32.totalorder %s19, 1
      %p72 = scmp.ne.s32.totalorder %s67, %s69
      %p73 = scmp.eq.s32.totalorder %s19, 0
      %p74 = por %p72, %p73
      %p75 = scmp.ne.s32.totalorder %s67, %s69
      %p76 = scmp.eq.s32.totalorder %s24, 1
      %p77 = por %p75, %p76
      %p78 = scmp.ne.s32.totalorder %s69, %s70
      %p79 = scmp.eq.s32.totalorder %s24, 0
      %p80 = por %p78, %p79
      %p81 = scmp.ne.s32.totalorder %s69, %s70
      %p82 = scmp.eq.s32.totalorder %s25, 1
      %p83 = por %p81, %p82
      %p85 = scmp.ne.s32.totalorder %s70, %s84
      %p86 = scmp.eq.s32.totalorder %s25, 0
      %p87 = por %p85, %p86
      %s88 = ssub.s32 %s26, %s38
      %p89 = scmp.eq.s32.totalorder %s88, 0
      %s91 = sadd.s32 %s90, 1
      %s92 = scalar_select %p89, %s90, %s91
      %p95 = pneg %p89
      %p96 = scmp.eq.s32.totalorder %s19, 1
      %p97 = por %p95, %p96
      %p98 = scmp.ne.s32.totalorder %s90, %s93
      %p99 = scmp.eq.s32.totalorder %s19, 0
      %p100 = por %p98, %p99
      %p101 = scmp.ne.s32.totalorder %s90, %s93
      %p102 = scmp.eq.s32.totalorder %s24, 1
      %p103 = por %p101, %p102
      %p104 = scmp.ne.s32.totalorder %s93, %s94
      %p105 = scmp.eq.s32.totalorder %s24, 0
      %p106 = por %p104, %p105
      %p107 = scmp.ne.s32.totalorder %s93, %s94
      %p108 = scmp.eq.s32.totalorder %s25, 1
      %p109 = por %p107, %p108
      %p111 = scmp.ne.s32.totalorder %s94, %s110
      %p112 = scmp.eq.s32.totalorder %s25, 0
      %p113 = por %p111, %p112
      %s115 = sadd.s32 %s114, 1
      %p118 = scmp.eq.s32.totalorder %s19, 1
      %p119 = scmp.ne.s32.totalorder %s114, %s116
      %p120 = scmp.eq.s32.totalorder %s19, 0
      %p121 = por %p119, %p120
      %p122 = scmp.ne.s32.totalorder %s114, %s116
      %p123 = scmp.eq.s32.totalorder %s24, 1
      %p124 = por %p122, %p123
      %p125 = scmp.ne.s32.totalorder %s116, %s117
      %p126 = scmp.eq.s32.totalorder %s24, 0
      %p127 = por %p125, %p126
      %p128 = scmp.ne.s32.totalorder %s116, %s117
      %p129 = scmp.eq.s32.totalorder %s25, 1
      %p130 = por %p128, %p129
      %p132 = scmp.ne.s32.totalorder %s117, %s131
      %p133 = scmp.eq.s32.totalorder %s25, 0
      %p134 = por %p132, %p133
      %s136 = sadd.s32 %s135, 1
      %p139 = scmp.eq.s32.totalorder %s19, 1
      %p140 = scmp.ne.s32.totalorder %s135, %s137
      %p141 = scmp.eq.s32.totalorder %s19, 0
      %p142 = por %p140, %p141
      %p143 = scmp.ne.s32.totalorder %s135, %s137
      %p144 = scmp.eq.s32.totalorder %s24, 1
      %p145 = por %p143, %p144
      %p146 = scmp.ne.s32.totalorder %s137, %s138
      %p147 = scmp.eq.s32.totalorder %s24, 0
      %p148 = por %p146, %p147
      %p149 = scmp.ne.s32.totalorder %s137, %s138
      %p150 = scmp.eq.s32.totalorder %s25, 1
      %p151 = por %p149, %p150
      %p153 = scmp.ne.s32.totalorder %s138, %s152
      %p154 = scmp.eq.s32.totalorder %s25, 0
      %p155 = por %p153, %p154
      %s157 = sadd.s32 %s156, 1
      %p160 = scmp.eq.s32.totalorder %s19, 1
      %p161 = scmp.ne.s32.totalorder %s156, %s158
      %p162 = scmp.eq.s32.totalorder %s19, 0
      %p163 = por %p161, %p162
      %p164 = scmp.ne.s32.totalorder %s156, %s158
      %p165 = scmp.eq.s32.totalorder %s24, 1
      %p166 = por %p164, %p165
      %p167 = scmp.ne.s32.totalorder %s158, %s159
      %p168 = scmp.eq.s32.totalorder %s24, 0
      %p169 = por %p167, %p168
      %p170 = scmp.ne.s32.totalorder %s158, %s159
      %p171 = scmp.eq.s32.totalorder %s25, 1
      %p172 = por %p170, %p171
      %p174 = scmp.ne.s32.totalorder %s159, %s173
      %p175 = scmp.eq.s32.totalorder %s25, 0
      %p176 = por %p174, %p175
      %s178 = sadd.s32 %s177, 1
      %p181 = scmp.eq.s32.totalorder %s19, 1
      %p182 = scmp.ne.s32.totalorder %s177, %s179
      %p183 = scmp.eq.s32.totalorder %s19, 0
      %p184 = por %p182, %p183
      %p185 = scmp.ne.s32.totalorder %s177, %s179
      %p186 = scmp.eq.s32.totalorder %s24, 1
      %p187 = por %p185, %p186
      %p188 = scmp.ne.s32.totalorder %s179, %s180
      %p189 = scmp.eq.s32.totalorder %s24, 0
      %p190 = por %p188, %p189
      %p191 = scmp.ne.s32.totalorder %s179, %s180
      %p192 = scmp.eq.s32.totalorder %s25, 1
      %p193 = por %p191, %p192
      %p195 = scmp.ne.s32.totalorder %s180, %s194
      %p196 = scmp.eq.s32.totalorder %s25, 0
      %p197 = por %p195, %p196
      %s198 = ssub.s32 %s26, %s38
      %p199 = scmp.eq.s32.totalorder %s198, 0
      %s201 = sadd.s32 %s200, 1
      %s202 = scalar_select %p199, %s200, %s201
      %p205 = pneg %p199
      %p206 = scmp.eq.s32.totalorder %s19, 1
      %p207 = por %p205, %p206
      %p208 = scmp.ne.s32.totalorder %s200, %s203
      %p209 = scmp.eq.s32.totalorder %s19, 0
      %p210 = por %p208, %p209
      %p211 = scmp.ne.s32.totalorder %s200, %s203
      %p212 = scmp.eq.s32.totalorder %s24, 1
      %p213 = por %p211, %p212
      %p214 = scmp.ne.s32.totalorder %s203, %s204
      %p215 = scmp.eq.s32.totalorder %s24, 0
      %p216 = por %p214, %p215
      %p217 = scmp.ne.s32.totalorder %s203, %s204
      %p218 = scmp.eq.s32.totalorder %s25, 1
      %p219 = por %p217, %p218
      %p221 = scmp.ne.s32.totalorder %s204, %s220
      %p222 = scmp.eq.s32.totalorder %s25, 0
      %p223 = por %p221, %p222
      %p224 = scmp.le.s32.totalorder 1, %s19
      %p225 = scmp.lt.s32.totalorder %s19, 3
      %p226 = pnand %p224, %p225
      %p227 = pneg %p226
      // Predicated region
      $region9: #{tpu_custom_call.1} parent=5 // pred_check
        _
      $region10: #{tpu_custom_call.1} parent=5 // pred_check_branch
        %229 = sbr.rel (%p226) target = $region12
      $region11: #{tpu_custom_call.1} parent=5 // pred_region
        %s230 = ssub.s32 %s19, 1
        // Predicated region
        $region13: #{tpu_custom_call.1} parent=11 // pred_check
          %p231 = pneg %p80
        $region14: #{tpu_custom_call.1} parent=11 // pred_check_branch
          %233 = sbr.rel (%p231) target = $region16
        $region15: #{tpu_custom_call.1} parent=11 // pred_region
          _
        $region16: #{tpu_custom_call.1} parent=11 // pred_fallthru
          _
        // Predicated region
        $region17: #{tpu_custom_call.1} parent=11 // pred_check
          %p234 = pneg %p127
        $region18: #{tpu_custom_call.1} parent=11 // pred_check_branch
          %236 = sbr.rel (%p234) target = $region20
        $region19: #{tpu_custom_call.1} parent=11 // pred_region
          _
        $region20: #{tpu_custom_call.1} parent=11 // pred_fallthru
          _
        // Predicated region
        $region21: #{tpu_custom_call.1} parent=11 // pred_check
          %p237 = pneg %p148
        $region22: #{tpu_custom_call.1} parent=11 // pred_check_branch
          %239 = sbr.rel (%p237) target = $region24
        $region23: #{tpu_custom_call.1} parent=11 // pred_region
          _
        $region24: #{tpu_custom_call.1} parent=11 // pred_fallthru
          _
        // Predicated region
        $region25: #{tpu_custom_call.1} parent=11 // pred_check
          %p240 = pneg %p169
        $region26: #{tpu_custom_call.1} parent=11 // pred_check_branch
          %242 = sbr.rel (%p240) target = $region28
        $region27: #{tpu_custom_call.1} parent=11 // pred_region
          _
        $region28: #{tpu_custom_call.1} parent=11 // pred_fallthru
          _
        // Predicated region
        $region29: #{tpu_custom_call.1} parent=11 // pred_check
          %p243 = pneg %p190
        $region30: #{tpu_custom_call.1} parent=11 // pred_check_branch
          %245 = sbr.rel (%p243) target = $region32
        $region31: #{tpu_custom_call.1} parent=11 // pred_region
          _
        $region32: #{tpu_custom_call.1} parent=11 // pred_fallthru
          _
      $region12: #{tpu_custom_call.1} parent=5 // pred_fallthru
        _
      %p246 = scmp.lt.s32.totalorder %s19, 2
      // Predicated region
      $region33: #{tpu_custom_call.1} parent=5 // pred_check
        %p247 = pneg %p246
      $region34: #{tpu_custom_call.1} parent=5 // pred_check_branch
        %249 = sbr.rel (%p247) target = $region36
      $region35: #{tpu_custom_call.1} parent=5 // pred_region
        // Predicated region
        $region37: #{tpu_custom_call.1} parent=35 // pred_check
          %p250 = pneg %p53
        $region38: #{tpu_custom_call.1} parent=35 // pred_check_branch
          %252 = sbr.rel (%p250) target = $region40
        $region39: #{tpu_custom_call.1} parent=35 // pred_region
          %s253 = sand.u32 %s43, 1
          %s254 = scalar_lea.sflag [#allocation4], %s253
          %s255 = sand.u32 %s43, 1
          %s256 = smul.addr %s255, 512
          %s257 = scalar_lea.vmem [#allocation3], %s256
          %s258 = smul.u32 32, %s26
          %s259 = smul.u32 4, %s27
          %261 = vsyncadd %s254, 0
          %s262 = smul.addr %s258, 4
          %s263 = sadd.s32 %s259, %s262
          %s264 = smul.addr %s263, 4
          %s265 = scalar_lea.hbm %s0, %s264
          %s266 = sshll.u32 %s265, 4
          %s267 = int_to_ptr.hbm [resolvable:$true] %s266
          %s268 = sshll.u32 %s257, 4
          %s269 = int_to_ptr.vmem [resolvable:$true] %s268
          %274 = dma.hbm_to_vmem [thread:$0]  %s267, 8192, %s269, %s254, 256, 256, 16
        $region40: #{tpu_custom_call.1} parent=35 // pred_fallthru
          _
        // Predicated region
        $region41: #{tpu_custom_call.1} parent=35 // pred_check
          %p275 = pneg %p100
        $region42: #{tpu_custom_call.1} parent=35 // pred_check_branch
          %277 = sbr.rel (%p275) target = $region44
        $region43: #{tpu_custom_call.1} parent=35 // pred_region
          %s278 = smul.u32 32, %s26
          %p279 = scmp.lt.s32.totalorder %s278, 63
          %s280 = scalar_select %p279, %s278, 63
          %s281 = smul.addr %s280, 8
          %s282 = scalar_lea.vmem %s2, %s281
          %s283 = smul.u32 32, %s26
        $region44: #{tpu_custom_call.1} parent=35 // pred_fallthru
          _
      $region36: #{tpu_custom_call.1} parent=5 // pred_fallthru
        _
      %p284 = scmp.le.s32.totalorder 1, %s19
      %p285 = scmp.lt.s32.totalorder %s19, 3
      %p286 = pnand %p284, %p285
      %p287 = pneg %p286
      // Predicated region
      $region45: #{tpu_custom_call.1} parent=5 // pred_check
        _
      $region46: #{tpu_custom_call.1} parent=5 // pred_check_branch
        %289 = sbr.rel (%p286) target = $region48
      $region47: #{tpu_custom_call.1} parent=5 // pred_region
        %s290 = ssub.s32 %s19, 1
        %s291 = sand.u32 %s46, 1
        %s292 = scalar_lea.sflag [#allocation4], %s291
        %s293 = sand.u32 %s46, 1
        %s294 = smul.addr %s293, 512
        %s295 = scalar_lea.vmem [#allocation3], %s294
        // Predicated region
        $region49: #{tpu_custom_call.1} parent=47 // pred_check
          %p296 = pneg %p59
        $region50: #{tpu_custom_call.1} parent=47 // pred_check_branch
          %298 = sbr.rel (%p296) target = $region52
        $region51: #{tpu_custom_call.1} parent=47 // pred_region
          %300 = dma.done %s292, 8192
        $region52: #{tpu_custom_call.1} parent=47 // pred_fallthru
          _
        %s301 = sand.u32 %s46, 1
        %s302 = scalar_lea.sflag [#allocation4], %s301
        %s303 = sand.u32 %s46, 1
        %s304 = smul.addr %s303, 512
        %s305 = scalar_lea.vmem [#allocation3], %s304
        %p306 = pneg %p59
        %p307 = pneg %p56
        %p308 = pneg %p80
        %p309 = pneg %p77
        %s310 = smul.u32 32, %s28
        %p311 = scmp.lt.s32.totalorder %s310, 63
        %s312 = scalar_select %p311, %s310, 63
        %s313 = smul.addr %s312, 8
        %s314 = scalar_lea.vmem %s2, %s313
        %p315 = pneg %p106
        %p316 = pneg %p103
        %p317 = pneg %p127
        %p318 = pneg %p124
        %p319 = pneg %p148
        %p320 = pneg %p145
        %p321 = pneg %p169
        %p322 = pneg %p166
        %p323 = pneg %p190
        %p324 = pneg %p187
        %p325 = pneg %p216
        %p326 = pneg %p213
        %s327 = sand.u32 %s203, 1
        %s328 = scalar_lea.sflag [#allocation5], %s327
        %s329 = sand.u32 %s203, 1
        %s330 = smul.addr %s329, 256
        %s331 = scalar_lea.vmem [#allocation6], %s330
        %s332 = smul.u32 32, %s28
        %s333 = smul.u32 4, %s29
        %s334 = smul.u32 32, %s28
        %p335 = scmp.lt.s32.totalorder %s334, 63
        %s336 = scalar_select %p335, %s334, 63
        %s337 = smul.addr %s336, 8
        %s338 = scalar_lea.vmem %s2, %s337
        %s339 = smul.u32 32, %s28
        %s340 = smul.u32 32, %s28
        %p341 = scmp.eq.s32.totalorder %s29, 0
        // Predicated region
        $region53: #{tpu_custom_call.1} parent=47 // pred_check
          %p342 = pneg %p341
        $region54: #{tpu_custom_call.1} parent=47 // pred_check_branch
          %344 = sbr.rel (%p342) target = $region56
        $region55: #{tpu_custom_call.1} parent=47 // pred_region
          %345 = vst [vmem:[#allocation2] sm:$0xff] 0.0
          %346 = vst [vmem:[#allocation2 + $0x8] sm:$0xff] 0.0
          %347 = vst [vmem:[#allocation2 + $0x10] sm:$0xff] 0.0
          %348 = vst [vmem:[#allocation2 + $0x18] sm:$0xff] 0.0
          %349 = vst [vmem:[#allocation2 + $0x20] sm:$0xff] 0.0
          %350 = vst [vmem:[#allocation2 + $0x28] sm:$0xff] 0.0
          %351 = vst [vmem:[#allocation2 + $0x30] sm:$0xff] 0.0
          %352 = vst [vmem:[#allocation2 + $0x38] sm:$0xff] 0.0
          %353 = vst [vmem:[#allocation2 + $0x40] sm:$0xff] 0.0
          %354 = vst [vmem:[#allocation2 + $0x48] sm:$0xff] 0.0
          %355 = vst [vmem:[#allocation2 + $0x50] sm:$0xff] 0.0
          %356 = vst [vmem:[#allocation2 + $0x58] sm:$0xff] 0.0
          %357 = vst [vmem:[#allocation2 + $0x60] sm:$0xff] 0.0
          %358 = vst [vmem:[#allocation2 + $0x68] sm:$0xff] 0.0
          %359 = vst [vmem:[#allocation2 + $0x70] sm:$0xff] 0.0
          %360 = vst [vmem:[#allocation2 + $0x78] sm:$0xff] 0.0
          %361 = vst [vmem:[#allocation2 + $0x80] sm:$0xff] 0.0
          %362 = vst [vmem:[#allocation2 + $0x88] sm:$0xff] 0.0
          %363 = vst [vmem:[#allocation2 + $0x90] sm:$0xff] 0.0
          %364 = vst [vmem:[#allocation2 + $0x98] sm:$0xff] 0.0
          %365 = vst [vmem:[#allocation2 + $0xa0] sm:$0xff] 0.0
          %366 = vst [vmem:[#allocation2 + $0xa8] sm:$0xff] 0.0
          %367 = vst [vmem:[#allocation2 + $0xb0] sm:$0xff] 0.0
          %368 = vst [vmem:[#allocation2 + $0xb8] sm:$0xff] 0.0
          %369 = vst [vmem:[#allocation2 + $0xc0] sm:$0xff] 0.0
          %370 = vst [vmem:[#allocation2 + $0xc8] sm:$0xff] 0.0
          %371 = vst [vmem:[#allocation2 + $0xd0] sm:$0xff] 0.0
          %372 = vst [vmem:[#allocation2 + $0xd8] sm:$0xff] 0.0
          %373 = vst [vmem:[#allocation2 + $0xe0] sm:$0xff] 0.0
          %374 = vst [vmem:[#allocation2 + $0xe8] sm:$0xff] 0.0
          %375 = vst [vmem:[#allocation2 + $0xf0] sm:$0xff] 0.0
          %376 = vst [vmem:[#allocation2 + $0xf8] sm:$0xff] 0.0
        $region56: #{tpu_custom_call.1} parent=47 // pred_fallthru
          _
        %s377 = smul.u32 %s29, 512
        %s378 = sshra.s32 %s377, 3
        %s379 = sand.u32 %s377, 7
        %s380 = smul.addr %s378, 4
        %s381 = scalar_lea.vmem %s1, %s380
        %v382 = vld [vmem:[%s381] sm:$0xf]
        %v383 = vld [vmem:[%s381 + $0x4] sm:$0xf]
        %v384 = vld [vmem:[%s381 + $0x8] sm:$0xf]
        %v385 = vld [vmem:[%s381 + $0xc] sm:$0xf]
        %v386 = vld [vmem:[%s381 + $0x10] sm:$0xf]
        %v387 = vld [vmem:[%s381 + $0x14] sm:$0xf]
        %v388 = vld [vmem:[%s381 + $0x18] sm:$0xf]
        %v389 = vld [vmem:[%s381 + $0x1c] sm:$0xf]
        %v390 = vld [vmem:[%s381 + $0x20] sm:$0xf]
        %v391 = vld [vmem:[%s381 + $0x24] sm:$0xf]
        %v392 = vld [vmem:[%s381 + $0x28] sm:$0xf]
        %v393 = vld [vmem:[%s381 + $0x2c] sm:$0xf]
        %v394 = vld [vmem:[%s381 + $0x30] sm:$0xf]
        %v395 = vld [vmem:[%s381 + $0x34] sm:$0xf]
        %v396 = vld [vmem:[%s381 + $0x38] sm:$0xf]
        %v397 = vld [vmem:[%s381 + $0x3c] sm:$0xf]
        %v398 = vld [vmem:[%s381 + $0x40] sm:$0xf]
        %v399 = vld [vmem:[%s381 + $0x44] sm:$0xf]
        %v400 = vld [vmem:[%s381 + $0x48] sm:$0xf]
        %v401 = vld [vmem:[%s381 + $0x4c] sm:$0xf]
        %v402 = vld [vmem:[%s381 + $0x50] sm:$0xf]
        %v403 = vld [vmem:[%s381 + $0x54] sm:$0xf]
        %v404 = vld [vmem:[%s381 + $0x58] sm:$0xf]
        %v405 = vld [vmem:[%s381 + $0x5c] sm:$0xf]
        %v406 = vld [vmem:[%s381 + $0x60] sm:$0xf]
        %v407 = vld [vmem:[%s381 + $0x64] sm:$0xf]
        %v408 = vld [vmem:[%s381 + $0x68] sm:$0xf]
        %v409 = vld [vmem:[%s381 + $0x6c] sm:$0xf]
        %v410 = vld [vmem:[%s381 + $0x70] sm:$0xf]
        %v411 = vld [vmem:[%s381 + $0x74] sm:$0xf]
        %v412 = vld [vmem:[%s381 + $0x78] sm:$0xf]
        %v413 = vld [vmem:[%s381 + $0x7c] sm:$0xf]
        %v414 = vld [vmem:[%s381 + $0x80] sm:$0xf]
        %v415 = vld [vmem:[%s381 + $0x84] sm:$0xf]
        %v416 = vld [vmem:[%s381 + $0x88] sm:$0xf]
        %v417 = vld [vmem:[%s381 + $0x8c] sm:$0xf]
        %v418 = vld [vmem:[%s381 + $0x90] sm:$0xf]
        %v419 = vld [vmem:[%s381 + $0x94] sm:$0xf]
        %v420 = vld [vmem:[%s381 + $0x98] sm:$0xf]
        %v421 = vld [vmem:[%s381 + $0x9c] sm:$0xf]
        %v422 = vld [vmem:[%s381 + $0xa0] sm:$0xf]
        %v423 = vld [vmem:[%s381 + $0xa4] sm:$0xf]
        %v424 = vld [vmem:[%s381 + $0xa8] sm:$0xf]
        %v425 = vld [vmem:[%s381 + $0xac] sm:$0xf]
        %v426 = vld [vmem:[%s381 + $0xb0] sm:$0xf]
        %v427 = vld [vmem:[%s381 + $0xb4] sm:$0xf]
        %v428 = vld [vmem:[%s381 + $0xb8] sm:$0xf]
        %v429 = vld [vmem:[%s381 + $0xbc] sm:$0xf]
        %v430 = vld [vmem:[%s381 + $0xc0] sm:$0xf]
        %v431 = vld [vmem:[%s381 + $0xc4] sm:$0xf]
        %v432 = vld [vmem:[%s381 + $0xc8] sm:$0xf]
        %v433 = vld [vmem:[%s381 + $0xcc] sm:$0xf]
        %v434 = vld [vmem:[%s381 + $0xd0] sm:$0xf]
        %v435 = vld [vmem:[%s381 + $0xd4] sm:$0xf]
        %v436 = vld [vmem:[%s381 + $0xd8] sm:$0xf]
        %v437 = vld [vmem:[%s381 + $0xdc] sm:$0xf]
        %v438 = vld [vmem:[%s381 + $0xe0] sm:$0xf]
        %v439 = vld [vmem:[%s381 + $0xe4] sm:$0xf]
        %v440 = vld [vmem:[%s381 + $0xe8] sm:$0xf]
        %v441 = vld [vmem:[%s381 + $0xec] sm:$0xf]
        %v442 = vld [vmem:[%s381 + $0xf0] sm:$0xf]
        %v443 = vld [vmem:[%s381 + $0xf4] sm:$0xf]
        %v444 = vld [vmem:[%s381 + $0xf8] sm:$0xf]
        %v445 = vld [vmem:[%s381 + $0xfc] sm:$0xf]
        %v446 = vld [vmem:[#allocation2] sm:$0xff]
        %v447 = vld [vmem:[#allocation2 + $0x8] sm:$0xff]
        %v448 = vld [vmem:[#allocation2 + $0x10] sm:$0xff]
        %v449 = vld [vmem:[#allocation2 + $0x18] sm:$0xff]
        %v450 = vld [vmem:[#allocation2 + $0x20] sm:$0xff]
        %v451 = vld [vmem:[#allocation2 + $0x28] sm:$0xff]
        %v452 = vld [vmem:[#allocation2 + $0x30] sm:$0xff]
        %v453 = vld [vmem:[#allocation2 + $0x38] sm:$0xff]
        %v454 = vld [vmem:[#allocation2 + $0x40] sm:$0xff]
        %v455 = vld [vmem:[#allocation2 + $0x48] sm:$0xff]
        %v456 = vld [vmem:[#allocation2 + $0x50] sm:$0xff]
        %v457 = vld [vmem:[#allocation2 + $0x58] sm:$0xff]
        %v458 = vld [vmem:[#allocation2 + $0x60] sm:$0xff]
        %v459 = vld [vmem:[#allocation2 + $0x68] sm:$0xff]
        %v460 = vld [vmem:[#allocation2 + $0x70] sm:$0xff]
        %v461 = vld [vmem:[#allocation2 + $0x78] sm:$0xff]
        %v462 = vld [vmem:[#allocation2 + $0x80] sm:$0xff]
        %v463 = vld [vmem:[#allocation2 + $0x88] sm:$0xff]
        %v464 = vld [vmem:[#allocation2 + $0x90] sm:$0xff]
        %v465 = vld [vmem:[#allocation2 + $0x98] sm:$0xff]
        %v466 = vld [vmem:[#allocation2 + $0xa0] sm:$0xff]
        %v467 = vld [vmem:[#allocation2 + $0xa8] sm:$0xff]
        %v468 = vld [vmem:[#allocation2 + $0xb0] sm:$0xff]
        %v469 = vld [vmem:[#allocation2 + $0xb8] sm:$0xff]
        %v470 = vld [vmem:[#allocation2 + $0xc0] sm:$0xff]
        %v471 = vld [vmem:[#allocation2 + $0xc8] sm:$0xff]
        %v472 = vld [vmem:[#allocation2 + $0xd0] sm:$0xff]
        %v473 = vld [vmem:[#allocation2 + $0xd8] sm:$0xff]
        %v474 = vld [vmem:[#allocation2 + $0xe0] sm:$0xff]
        %v475 = vld [vmem:[#allocation2 + $0xe8] sm:$0xff]
        %v476 = vld [vmem:[#allocation2 + $0xf0] sm:$0xff]
        %v477 = vld [vmem:[#allocation2 + $0xf8] sm:$0xff]
        %v478 = vld [vmem:[%s295] sm:$0xff]
        %v479 = vld [vmem:[%s295 + $0x8] sm:$0xff]
        %v480 = vld [vmem:[%s295 + $0x10] sm:$0xff]
        %v481 = vld [vmem:[%s295 + $0x18] sm:$0xff]
        %v482 = vld [vmem:[%s295 + $0x20] sm:$0xff]
        %v483 = vld [vmem:[%s295 + $0x28] sm:$0xff]
        %v484 = vld [vmem:[%s295 + $0x30] sm:$0xff]
        %v485 = vld [vmem:[%s295 + $0x38] sm:$0xff]
        %v486 = vld [vmem:[%s295 + $0x40] sm:$0xff]
        %v487 = vld [vmem:[%s295 + $0x48] sm:$0xff]
        %v488 = vld [vmem:[%s295 + $0x50] sm:$0xff]
        %v489 = vld [vmem:[%s295 + $0x58] sm:$0xff]
        %v490 = vld [vmem:[%s295 + $0x60] sm:$0xff]
        %v491 = vld [vmem:[%s295 + $0x68] sm:$0xff]
        %v492 = vld [vmem:[%s295 + $0x70] sm:$0xff]
        %v493 = vld [vmem:[%s295 + $0x78] sm:$0xff]
        %v494 = vld [vmem:[%s295 + $0x80] sm:$0xff]
        %v495 = vld [vmem:[%s295 + $0x88] sm:$0xff]
        %v496 = vld [vmem:[%s295 + $0x90] sm:$0xff]
        %v497 = vld [vmem:[%s295 + $0x98] sm:$0xff]
        %v498 = vld [vmem:[%s295 + $0xa0] sm:$0xff]
        %v499 = vld [vmem:[%s295 + $0xa8] sm:$0xff]
        %v500 = vld [vmem:[%s295 + $0xb0] sm:$0xff]
        %v501 = vld [vmem:[%s295 + $0xb8] sm:$0xff]
        %v502 = vld [vmem:[%s295 + $0xc0] sm:$0xff]
        %v503 = vld [vmem:[%s295 + $0xc8] sm:$0xff]
        %v504 = vld [vmem:[%s295 + $0xd0] sm:$0xff]
        %v505 = vld [vmem:[%s295 + $0xd8] sm:$0xff]
        %v506 = vld [vmem:[%s295 + $0xe0] sm:$0xff]
        %v507 = vld [vmem:[%s295 + $0xe8] sm:$0xff]
        %v508 = vld [vmem:[%s295 + $0xf0] sm:$0xff]
        %v509 = vld [vmem:[%s295 + $0xf8] sm:$0xff]
        %v510 = vld [vmem:[%s295 + $0x100] sm:$0xff]
        %v511 = vld [vmem:[%s295 + $0x108] sm:$0xff]
        %v512 = vld [vmem:[%s295 + $0x110] sm:$0xff]
        %v513 = vld [vmem:[%s295 + $0x118] sm:$0xff]
        %v514 = vld [vmem:[%s295 + $0x120] sm:$0xff]
        %v515 = vld [vmem:[%s295 + $0x128] sm:$0xff]
        %v516 = vld [vmem:[%s295 + $0x130] sm:$0xff]
        %v517 = vld [vmem:[%s295 + $0x138] sm:$0xff]
        %v518 = vld [vmem:[%s295 + $0x140] sm:$0xff]
        %v519 = vld [vmem:[%s295 + $0x148] sm:$0xff]
        %v520 = vld [vmem:[%s295 + $0x150] sm:$0xff]
        %v521 = vld [vmem:[%s295 + $0x158] sm:$0xff]
        %v522 = vld [vmem:[%s295 + $0x160] sm:$0xff]
        %v523 = vld [vmem:[%s295 + $0x168] sm:$0xff]
        %v524 = vld [vmem:[%s295 + $0x170] sm:$0xff]
        %v525 = vld [vmem:[%s295 + $0x178] sm:$0xff]
        %v526 = vld [vmem:[%s295 + $0x180] sm:$0xff]
        %v527 = vld [vmem:[%s295 + $0x188] sm:$0xff]
        %v528 = vld [vmem:[%s295 + $0x190] sm:$0xff]
        %v529 = vld [vmem:[%s295 + $0x198] sm:$0xff]
        %v530 = vld [vmem:[%s295 + $0x1a0] sm:$0xff]
        %v531 = vld [vmem:[%s295 + $0x1a8] sm:$0xff]
        %v532 = vld [vmem:[%s295 + $0x1b0] sm:$0xff]
        %v533 = vld [vmem:[%s295 + $0x1b8] sm:$0xff]
        %v534 = vld [vmem:[%s295 + $0x1c0] sm:$0xff]
        %v535 = vld [vmem:[%s295 + $0x1c8] sm:$0xff]
        %v536 = vld [vmem:[%s295 + $0x1d0] sm:$0xff]
        %v537 = vld [vmem:[%s295 + $0x1d8] sm:$0xff]
        %v538 = vld [vmem:[%s295 + $0x1e0] sm:$0xff]
        %v539 = vld [vmem:[%s295 + $0x1e8] sm:$0xff]
        %v540 = vld [vmem:[%s295 + $0x1f0] sm:$0xff]
        %v541 = vld [vmem:[%s295 + $0x1f8] sm:$0xff]
        %v606 = vunpack.c.l.b16 %v478
        %v607 = vunpack.c.h.b16 %v478
        %v608 = vunpack.c.l.b16 %v479
        %v609 = vunpack.c.h.b16 %v479
        %v610 = vunpack.c.l.b16 %v480
        %v611 = vunpack.c.h.b16 %v480
        %v612 = vunpack.c.l.b16 %v481
        %v613 = vunpack.c.h.b16 %v481
        %v614 = vunpack.c.l.b16 %v482
        %v615 = vunpack.c.h.b16 %v482
        %v616 = vunpack.c.l.b16 %v483
        %v617 = vunpack.c.h.b16 %v483
        %v618 = vunpack.c.l.b16 %v484
        %v619 = vunpack.c.h.b16 %v484
        %v620 = vunpack.c.l.b16 %v485
        %v621 = vunpack.c.h.b16 %v485
        %v622 = vunpack.c.l.b16 %v486
        %v623 = vunpack.c.h.b16 %v486
        %v624 = vunpack.c.l.b16 %v487
        %v625 = vunpack.c.h.b16 %v487
        %v626 = vunpack.c.l.b16 %v488
        %v627 = vunpack.c.h.b16 %v488
        %v628 = vunpack.c.l.b16 %v489
        %v629 = vunpack.c.h.b16 %v489
        %v630 = vunpack.c.l.b16 %v490
        %v631 = vunpack.c.h.b16 %v490
        %v632 = vunpack.c.l.b16 %v491
        %v633 = vunpack.c.h.b16 %v491
        %v634 = vunpack.c.l.b16 %v492
        %v635 = vunpack.c.h.b16 %v492
        %v636 = vunpack.c.l.b16 %v493
        %v637 = vunpack.c.h.b16 %v493
        %v638 = vunpack.c.l.b16 %v494
        %v639 = vunpack.c.h.b16 %v494
        %v640 = vunpack.c.l.b16 %v495
        %v641 = vunpack.c.h.b16 %v495
        %v642 = vunpack.c.l.b16 %v496
        %v643 = vunpack.c.h.b16 %v496
        %v644 = vunpack.c.l.b16 %v497
        %v645 = vunpack.c.h.b16 %v497
        %v646 = vunpack.c.l.b16 %v498
        %v647 = vunpack.c.h.b16 %v498
        %v648 = vunpack.c.l.b16 %v499
        %v649 = vunpack.c.h.b16 %v499
        %v650 = vunpack.c.l.b16 %v500
        %v651 = vunpack.c.h.b16 %v500
        %v652 = vunpack.c.l.b16 %v501
        %v653 = vunpack.c.h.b16 %v501
        %v654 = vunpack.c.l.b16 %v502
        %v655 = vunpack.c.h.b16 %v502
        %v656 = vunpack.c.l.b16 %v503
        %v657 = vunpack.c.h.b16 %v503
        %v658 = vunpack.c.l.b16 %v504
        %v659 = vunpack.c.h.b16 %v504
        %v660 = vunpack.c.l.b16 %v505
        %v661 = vunpack.c.h.b16 %v505
        %v662 = vunpack.c.l.b16 %v506
        %v663 = vunpack.c.h.b16 %v506
        %v664 = vunpack.c.l.b16 %v507
        %v665 = vunpack.c.h.b16 %v507
        %v666 = vunpack.c.l.b16 %v508
        %v667 = vunpack.c.h.b16 %v508
        %v668 = vunpack.c.l.b16 %v509
        %v669 = vunpack.c.h.b16 %v509
        %v670 = vunpack.c.l.b16 %v510
        %v671 = vunpack.c.h.b16 %v510
        %v672 = vunpack.c.l.b16 %v511
        %v673 = vunpack.c.h.b16 %v511
        %v674 = vunpack.c.l.b16 %v512
        %v675 = vunpack.c.h.b16 %v512
        %v676 = vunpack.c.l.b16 %v513
        %v677 = vunpack.c.h.b16 %v513
        %v678 = vunpack.c.l.b16 %v514
        %v679 = vunpack.c.h.b16 %v514
        %v680 = vunpack.c.l.b16 %v515
        %v681 = vunpack.c.h.b16 %v515
        %v682 = vunpack.c.l.b16 %v516
        %v683 = vunpack.c.h.b16 %v516
        %v684 = vunpack.c.l.b16 %v517
        %v685 = vunpack.c.h.b16 %v517
        %v686 = vunpack.c.l.b16 %v518
        %v687 = vunpack.c.h.b16 %v518
        %v688 = vunpack.c.l.b16 %v519
        %v689 = vunpack.c.h.b16 %v519
        %v690 = vunpack.c.l.b16 %v520
        %v691 = vunpack.c.h.b16 %v520
        %v692 = vunpack.c.l.b16 %v521
        %v693 = vunpack.c.h.b16 %v521
        %v694 = vunpack.c.l.b16 %v522
        %v695 = vunpack.c.h.b16 %v522
        %v696 = vunpack.c.l.b16 %v523
        %v697 = vunpack.c.h.b16 %v523
        %v698 = vunpack.c.l.b16 %v524
        %v699 = vunpack.c.h.b16 %v524
        %v700 = vunpack.c.l.b16 %v525
        %v701 = vunpack.c.h.b16 %v525
        %v702 = vunpack.c.l.b16 %v526
        %v703 = vunpack.c.h.b16 %v526
        %v704 = vunpack.c.l.b16 %v527
        %v705 = vunpack.c.h.b16 %v527
        %v706 = vunpack.c.l.b16 %v528
        %v707 = vunpack.c.h.b16 %v528
        %v708 = vunpack.c.l.b16 %v529
        %v709 = vunpack.c.h.b16 %v529
        %v710 = vunpack.c.l.b16 %v530
        %v711 = vunpack.c.h.b16 %v530
        %v712 = vunpack.c.l.b16 %v531
        %v713 = vunpack.c.h.b16 %v531
        %v714 = vunpack.c.l.b16 %v532
        %v715 = vunpack.c.h.b16 %v532
        %v716 = vunpack.c.l.b16 %v533
        %v717 = vunpack.c.h.b16 %v533
        %v718 = vunpack.c.l.b16 %v534
        %v719 = vunpack.c.h.b16 %v534
        %v720 = vunpack.c.l.b16 %v535
        %v721 = vunpack.c.h.b16 %v535
        %v722 = vunpack.c.l.b16 %v536
        %v723 = vunpack.c.h.b16 %v536
        %v724 = vunpack.c.l.b16 %v537
        %v725 = vunpack.c.h.b16 %v537
        %v726 = vunpack.c.l.b16 %v538
        %v727 = vunpack.c.h.b16 %v538
        %v728 = vunpack.c.l.b16 %v539
        %v729 = vunpack.c.h.b16 %v539
        %v730 = vunpack.c.l.b16 %v540
        %v731 = vunpack.c.h.b16 %v540
        %v732 = vunpack.c.l.b16 %v541
        %v733 = vunpack.c.h.b16 %v541
        %v734 = vpack.c.b16 %v610, %v606
        %v735 = vpack.c.b16 %v611, %v607
        %v736 = vpack.c.b16 %v612, %v608
        %v737 = vpack.c.b16 %v613, %v609
        %v738 = vpack.c.b16 %v618, %v614
        %v739 = vpack.c.b16 %v619, %v615
        %v740 = vpack.c.b16 %v620, %v616
        %v741 = vpack.c.b16 %v621, %v617
        %v742 = vpack.c.b16 %v626, %v622
        %v743 = vpack.c.b16 %v627, %v623
        %v744 = vpack.c.b16 %v628, %v624
        %v745 = vpack.c.b16 %v629, %v625
        %v746 = vpack.c.b16 %v634, %v630
        %v747 = vpack.c.b16 %v635, %v631
        %v748 = vpack.c.b16 %v636, %v632
        %v749 = vpack.c.b16 %v637, %v633
        %v750 = vpack.c.b16 %v642, %v638
        %v751 = vpack.c.b16 %v643, %v639
        %v752 = vpack.c.b16 %v644, %v640
        %v753 = vpack.c.b16 %v645, %v641
        %v754 = vpack.c.b16 %v650, %v646
        %v755 = vpack.c.b16 %v651, %v647
        %v756 = vpack.c.b16 %v652, %v648
        %v757 = vpack.c.b16 %v653, %v649
        %v758 = vpack.c.b16 %v658, %v654
        %v759 = vpack.c.b16 %v659, %v655
        %v760 = vpack.c.b16 %v660, %v656
        %v761 = vpack.c.b16 %v661, %v657
        %v762 = vpack.c.b16 %v666, %v662
        %v763 = vpack.c.b16 %v667, %v663
        %v764 = vpack.c.b16 %v668, %v664
        %v765 = vpack.c.b16 %v669, %v665
        %v766 = vpack.c.b16 %v674, %v670
        %v767 = vpack.c.b16 %v675, %v671
        %v768 = vpack.c.b16 %v676, %v672
        %v769 = vpack.c.b16 %v677, %v673
        %v770 = vpack.c.b16 %v682, %v678
        %v771 = vpack.c.b16 %v683, %v679
        %v772 = vpack.c.b16 %v684, %v680
        %v773 = vpack.c.b16 %v685, %v681
        %v774 = vpack.c.b16 %v690, %v686
        %v775 = vpack.c.b16 %v691, %v687
        %v776 = vpack.c.b16 %v692, %v688
        %v777 = vpack.c.b16 %v693, %v689
        %v778 = vpack.c.b16 %v698, %v694
        %v779 = vpack.c.b16 %v699, %v695
        %v780 = vpack.c.b16 %v700, %v696
        %v781 = vpack.c.b16 %v701, %v697
        %v782 = vpack.c.b16 %v706, %v702
        %v783 = vpack.c.b16 %v707, %v703
        %v784 = vpack.c.b16 %v708, %v704
        %v785 = vpack.c.b16 %v709, %v705
        %v786 = vpack.c.b16 %v714, %v710
        %v787 = vpack.c.b16 %v715, %v711
        %v788 = vpack.c.b16 %v716, %v712
        %v789 = vpack.c.b16 %v717, %v713
        %v790 = vpack.c.b16 %v722, %v718
        %v791 = vpack.c.b16 %v723, %v719
        %v792 = vpack.c.b16 %v724, %v720
        %v793 = vpack.c.b16 %v725, %v721
        %v794 = vpack.c.b16 %v730, %v726
        %v795 = vpack.c.b16 %v731, %v727
        %v796 = vpack.c.b16 %v732, %v728
        %v797 = vpack.c.b16 %v733, %v729
        %v926 = vunpack.c.l.b16 %v382
        %v927 = vunpack.c.l.b16 %v383
        %v928 = vunpack.c.l.b16 %v384
        %v929 = vunpack.c.l.b16 %v385
        %v930 = vunpack.c.l.b16 %v386
        %v931 = vunpack.c.l.b16 %v387
        %v932 = vunpack.c.l.b16 %v388
        %v933 = vunpack.c.l.b16 %v389
        %v934 = vunpack.c.l.b16 %v390
        %v935 = vunpack.c.l.b16 %v391
        %v936 = vunpack.c.l.b16 %v392
        %v937 = vunpack.c.l.b16 %v393
        %v938 = vunpack.c.l.b16 %v394
        %v939 = vunpack.c.l.b16 %v395
        %v940 = vunpack.c.l.b16 %v396
        %v941 = vunpack.c.l.b16 %v397
        %v942 = vunpack.c.l.b16 %v398
        %v943 = vunpack.c.l.b16 %v399
        %v944 = vunpack.c.l.b16 %v400
        %v945 = vunpack.c.l.b16 %v401
        %v946 = vunpack.c.l.b16 %v402
        %v947 = vunpack.c.l.b16 %v403
        %v948 = vunpack.c.l.b16 %v404
        %v949 = vunpack.c.l.b16 %v405
        %v950 = vunpack.c.l.b16 %v406
        %v951 = vunpack.c.l.b16 %v407
        %v952 = vunpack.c.l.b16 %v408
        %v953 = vunpack.c.l.b16 %v409
        %v954 = vunpack.c.l.b16 %v410
        %v955 = vunpack.c.l.b16 %v411
        %v956 = vunpack.c.l.b16 %v412
        %v957 = vunpack.c.l.b16 %v413
        %v958 = vunpack.c.l.b16 %v414
        %v959 = vunpack.c.l.b16 %v415
        %v960 = vunpack.c.l.b16 %v416
        %v961 = vunpack.c.l.b16 %v417
        %v962 = vunpack.c.l.b16 %v418
        %v963 = vunpack.c.l.b16 %v419
        %v964 = vunpack.c.l.b16 %v420
        %v965 = vunpack.c.l.b16 %v421
        %v966 = vunpack.c.l.b16 %v422
        %v967 = vunpack.c.l.b16 %v423
        %v968 = vunpack.c.l.b16 %v424
        %v969 = vunpack.c.l.b16 %v425
        %v970 = vunpack.c.l.b16 %v426
        %v971 = vunpack.c.l.b16 %v427
        %v972 = vunpack.c.l.b16 %v428
        %v973 = vunpack.c.l.b16 %v429
        %v974 = vunpack.c.l.b16 %v430
        %v975 = vunpack.c.l.b16 %v431
        %v976 = vunpack.c.l.b16 %v432
        %v977 = vunpack.c.l.b16 %v433
        %v978 = vunpack.c.l.b16 %v434
        %v979 = vunpack.c.l.b16 %v435
        %v980 = vunpack.c.l.b16 %v436
        %v981 = vunpack.c.l.b16 %v437
        %v982 = vunpack.c.l.b16 %v438
        %v983 = vunpack.c.l.b16 %v439
        %v984 = vunpack.c.l.b16 %v440
        %v985 = vunpack.c.l.b16 %v441
        %v986 = vunpack.c.l.b16 %v442
        %v987 = vunpack.c.l.b16 %v443
        %v988 = vunpack.c.l.b16 %v444
        %v989 = vunpack.c.l.b16 %v445
        %v990 = vpack.c.b16 %v927, %v926
        %v991 = vpack.c.b16 %v929, %v928
        %v992 = vpack.c.b16 %v931, %v930
        %v993 = vpack.c.b16 %v933, %v932
        %v994 = vpack.c.b16 %v935, %v934
        %v995 = vpack.c.b16 %v937, %v936
        %v996 = vpack.c.b16 %v939, %v938
        %v997 = vpack.c.b16 %v941, %v940
        %v998 = vpack.c.b16 %v943, %v942
        %v999 = vpack.c.b16 %v945, %v944
        %v1000 = vpack.c.b16 %v947, %v946
        %v1001 = vpack.c.b16 %v949, %v948
        %v1002 = vpack.c.b16 %v951, %v950
        %v1003 = vpack.c.b16 %v953, %v952
        %v1004 = vpack.c.b16 %v955, %v954
        %v1005 = vpack.c.b16 %v957, %v956
        %v1006 = vpack.c.b16 %v959, %v958
        %v1007 = vpack.c.b16 %v961, %v960
        %v1008 = vpack.c.b16 %v963, %v962
        %v1009 = vpack.c.b16 %v965, %v964
        %v1010 = vpack.c.b16 %v967, %v966
        %v1011 = vpack.c.b16 %v969, %v968
        %v1012 = vpack.c.b16 %v971, %v970
        %v1013 = vpack.c.b16 %v973, %v972
        %v1014 = vpack.c.b16 %v975, %v974
        %v1015 = vpack.c.b16 %v977, %v976
        %v1016 = vpack.c.b16 %v979, %v978
        %v1017 = vpack.c.b16 %v981, %v980
        %v1018 = vpack.c.b16 %v983, %v982
        %v1019 = vpack.c.b16 %v985, %v984
        %v1020 = vpack.c.b16 %v987, %v986
        %v1021 = vpack.c.b16 %v989, %v988
        %1054 = vmatpush.bf16.msra.mxu0 %v997
        %1055 = vmatpush.bf16.msra.mxu0 %v996
        %1056 = vmatpush.bf16.msra.mxu0 %v995
        %1057 = vmatpush.bf16.msra.mxu0 %v994
        %1058 = vmatpush.bf16.msra.mxu0 %v993
        %1059 = vmatpush.bf16.msra.mxu0 %v992
        %1060 = vmatpush.bf16.msra.mxu0 %v991
        %1061 = vmatpush.bf16.msra.mxu0 %v990
        %1062 = vmatmul.bf16.gmra.mxu0 %v734
        %v1063 = vpop.f32.mrf.mxu0
        %v1064 = vadd.f32 0.0, %v1063
        %v1065 = vpop.f32.mrf.mxu0
        %v1066 = vadd.f32 0.0, %v1065
        %1067 = vmatmul.bf16.gmra.mxu0 %v738
        %v1068 = vpop.f32.mrf.mxu0
        %v1069 = vadd.f32 0.0, %v1068
        %v1070 = vpop.f32.mrf.mxu0
        %v1071 = vadd.f32 0.0, %v1070
        %1072 = vmatmul.bf16.gmra.mxu0 %v742
        %v1073 = vpop.f32.mrf.mxu0
        %v1074 = vadd.f32 0.0, %v1073
        %v1075 = vpop.f32.mrf.mxu0
        %v1076 = vadd.f32 0.0, %v1075
        %1077 = vmatmul.bf16.gmra.mxu0 %v746
        %v1078 = vpop.f32.mrf.mxu0
        %v1079 = vadd.f32 0.0, %v1078
        %v1080 = vpop.f32.mrf.mxu0
        %v1081 = vadd.f32 0.0, %v1080
        %1082 = vmatmul.bf16.gmra.mxu0 %v750
        %v1083 = vpop.f32.mrf.mxu0
        %v1084 = vadd.f32 0.0, %v1083
        %v1085 = vpop.f32.mrf.mxu0
        %v1086 = vadd.f32 0.0, %v1085
        %1087 = vmatmul.bf16.gmra.mxu0 %v754
        %v1088 = vpop.f32.mrf.mxu0
        %v1089 = vadd.f32 0.0, %v1088
        %v1090 = vpop.f32.mrf.mxu0
        %v1091 = vadd.f32 0.0, %v1090
        %1092 = vmatmul.bf16.gmra.mxu0 %v758
        %v1093 = vpop.f32.mrf.mxu0
        %v1094 = vadd.f32 0.0, %v1093
        %v1095 = vpop.f32.mrf.mxu0
        %v1096 = vadd.f32 0.0, %v1095
        %1097 = vmatmul.bf16.gmra.mxu0 %v762
        %v1098 = vpop.f32.mrf.mxu0
        %v1099 = vadd.f32 0.0, %v1098
        %v1100 = vpop.f32.mrf.mxu0
        %v1101 = vadd.f32 0.0, %v1100
        %1102 = vmatmul.bf16.gmra.mxu0 %v766
        %v1103 = vpop.f32.mrf.mxu0
        %v1104 = vadd.f32 0.0, %v1103
        %v1105 = vpop.f32.mrf.mxu0
        %v1106 = vadd.f32 0.0, %v1105
        %1107 = vmatmul.bf16.gmra.mxu0 %v770
        %v1108 = vpop.f32.mrf.mxu0
        %v1109 = vadd.f32 0.0, %v1108
        %v1110 = vpop.f32.mrf.mxu0
        %v1111 = vadd.f32 0.0, %v1110
        %1112 = vmatmul.bf16.gmra.mxu0 %v774
        %v1113 = vpop.f32.mrf.mxu0
        %v1114 = vadd.f32 0.0, %v1113
        %v1115 = vpop.f32.mrf.mxu0
        %v1116 = vadd.f32 0.0, %v1115
        %1117 = vmatmul.bf16.gmra.mxu0 %v778
        %v1118 = vpop.f32.mrf.mxu0
        %v1119 = vadd.f32 0.0, %v1118
        %v1120 = vpop.f32.mrf.mxu0
        %v1121 = vadd.f32 0.0, %v1120
        %1122 = vmatmul.bf16.gmra.mxu0 %v782
        %v1123 = vpop.f32.mrf.mxu0
        %v1124 = vadd.f32 0.0, %v1123
        %v1125 = vpop.f32.mrf.mxu0
        %v1126 = vadd.f32 0.0, %v1125
        %1127 = vmatmul.bf16.gmra.mxu0 %v786
        %v1128 = vpop.f32.mrf.mxu0
        %v1129 = vadd.f32 0.0, %v1128
        %v1130 = vpop.f32.mrf.mxu0
        %v1131 = vadd.f32 0.0, %v1130
        %1132 = vmatmul.bf16.gmra.mxu0 %v790
        %v1133 = vpop.f32.mrf.mxu0
        %v1134 = vadd.f32 0.0, %v1133
        %v1135 = vpop.f32.mrf.mxu0
        %v1136 = vadd.f32 0.0, %v1135
        %1137 = vmatmul.bf16.gmra.mxu0 %v794
        %v1138 = vpop.f32.mrf.mxu0
        %v1139 = vadd.f32 0.0, %v1138
        %v1140 = vpop.f32.mrf.mxu0
        %v1141 = vadd.f32 0.0, %v1140
        %1142 = vdwg.mxu0
        %1143 = vmatpush.bf16.msra.mxu0 %v1005
        %1144 = vmatpush.bf16.msra.mxu0 %v1004
        %1145 = vmatpush.bf16.msra.mxu0 %v1003
        %1146 = vmatpush.bf16.msra.mxu0 %v1002
        %1147 = vmatpush.bf16.msra.mxu0 %v1001
        %1148 = vmatpush.bf16.msra.mxu0 %v1000
        %1149 = vmatpush.bf16.msra.mxu0 %v999
        %1150 = vmatpush.bf16.msra.mxu0 %v998
        %1151 = vmatmul.bf16.gmra.mxu0 %v735
        %v1152 = vpop.f32.mrf.mxu0
        %v1153 = vadd.f32 %v1064, %v1152
        %v1154 = vpop.f32.mrf.mxu0
        %v1155 = vadd.f32 %v1066, %v1154
        %1156 = vmatmul.bf16.gmra.mxu0 %v739
        %v1157 = vpop.f32.mrf.mxu0
        %v1158 = vadd.f32 %v1069, %v1157
        %v1159 = vpop.f32.mrf.mxu0
        %v1160 = vadd.f32 %v1071, %v1159
        %1161 = vmatmul.bf16.gmra.mxu0 %v743
        %v1162 = vpop.f32.mrf.mxu0
        %v1163 = vadd.f32 %v1074, %v1162
        %v1164 = vpop.f32.mrf.mxu0
        %v1165 = vadd.f32 %v1076, %v1164
        %1166 = vmatmul.bf16.gmra.mxu0 %v747
        %v1167 = vpop.f32.mrf.mxu0
        %v1168 = vadd.f32 %v1079, %v1167
        %v1169 = vpop.f32.mrf.mxu0
        %v1170 = vadd.f32 %v1081, %v1169
        %1171 = vmatmul.bf16.gmra.mxu0 %v751
        %v1172 = vpop.f32.mrf.mxu0
        %v1173 = vadd.f32 %v1084, %v1172
        %v1174 = vpop.f32.mrf.mxu0
        %v1175 = vadd.f32 %v1086, %v1174
        %1176 = vmatmul.bf16.gmra.mxu0 %v755
        %v1177 = vpop.f32.mrf.mxu0
        %v1178 = vadd.f32 %v1089, %v1177
        %v1179 = vpop.f32.mrf.mxu0
        %v1180 = vadd.f32 %v1091, %v1179
        %1181 = vmatmul.bf16.gmra.mxu0 %v759
        %v1182 = vpop.f32.mrf.mxu0
        %v1183 = vadd.f32 %v1094, %v1182
        %v1184 = vpop.f32.mrf.mxu0
        %v1185 = vadd.f32 %v1096, %v1184
        %1186 = vmatmul.bf16.gmra.mxu0 %v763
        %v1187 = vpop.f32.mrf.mxu0
        %v1188 = vadd.f32 %v1099, %v1187
        %v1189 = vpop.f32.mrf.mxu0
        %v1190 = vadd.f32 %v1101, %v1189
        %1191 = vmatmul.bf16.gmra.mxu0 %v767
        %v1192 = vpop.f32.mrf.mxu0
        %v1193 = vadd.f32 %v1104, %v1192
        %v1194 = vpop.f32.mrf.mxu0
        %v1195 = vadd.f32 %v1106, %v1194
        %1196 = vmatmul.bf16.gmra.mxu0 %v771
        %v1197 = vpop.f32.mrf.mxu0
        %v1198 = vadd.f32 %v1109, %v1197
        %v1199 = vpop.f32.mrf.mxu0
        %v1200 = vadd.f32 %v1111, %v1199
        %1201 = vmatmul.bf16.gmra.mxu0 %v775
        %v1202 = vpop.f32.mrf.mxu0
        %v1203 = vadd.f32 %v1114, %v1202
        %v1204 = vpop.f32.mrf.mxu0
        %v1205 = vadd.f32 %v1116, %v1204
        %1206 = vmatmul.bf16.gmra.mxu0 %v779
        %v1207 = vpop.f32.mrf.mxu0
        %v1208 = vadd.f32 %v1119, %v1207
        %v1209 = vpop.f32.mrf.mxu0
        %v1210 = vadd.f32 %v1121, %v1209
        %1211 = vmatmul.bf16.gmra.mxu0 %v783
        %v1212 = vpop.f32.mrf.mxu0
        %v1213 = vadd.f32 %v1124, %v1212
        %v1214 = vpop.f32.mrf.mxu0
        %v1215 = vadd.f32 %v1126, %v1214
        %1216 = vmatmul.bf16.gmra.mxu0 %v787
        %v1217 = vpop.f32.mrf.mxu0
        %v1218 = vadd.f32 %v1129, %v1217
        %v1219 = vpop.f32.mrf.mxu0
        %v1220 = vadd.f32 %v1131, %v1219
        %1221 = vmatmul.bf16.gmra.mxu0 %v791
        %v1222 = vpop.f32.mrf.mxu0
        %v1223 = vadd.f32 %v1134, %v1222
        %v1224 = vpop.f32.mrf.mxu0
        %v1225 = vadd.f32 %v1136, %v1224
        %1226 = vmatmul.bf16.gmra.mxu0 %v795
        %v1227 = vpop.f32.mrf.mxu0
        %v1228 = vadd.f32 %v1139, %v1227
        %v1229 = vpop.f32.mrf.mxu0
        %v1230 = vadd.f32 %v1141, %v1229
        %1231 = vdwg.mxu0
        %1232 = vmatpush.bf16.msra.mxu0 %v1013
        %1233 = vmatpush.bf16.msra.mxu0 %v1012
        %1234 = vmatpush.bf16.msra.mxu0 %v1011
        %1235 = vmatpush.bf16.msra.mxu0 %v1010
        %1236 = vmatpush.bf16.msra.mxu0 %v1009
        %1237 = vmatpush.bf16.msra.mxu0 %v1008
        %1238 = vmatpush.bf16.msra.mxu0 %v1007
        %1239 = vmatpush.bf16.msra.mxu0 %v1006
        %1240 = vmatmul.bf16.gmra.mxu0 %v736
        %v1241 = vpop.f32.mrf.mxu0
        %v1242 = vadd.f32 %v1153, %v1241
        %v1243 = vpop.f32.mrf.mxu0
        %v1244 = vadd.f32 %v1155, %v1243
        %1245 = vmatmul.bf16.gmra.mxu0 %v740
        %v1246 = vpop.f32.mrf.mxu0
        %v1247 = vadd.f32 %v1158, %v1246
        %v1248 = vpop.f32.mrf.mxu0
        %v1249 = vadd.f32 %v1160, %v1248
        %1250 = vmatmul.bf16.gmra.mxu0 %v744
        %v1251 = vpop.f32.mrf.mxu0
        %v1252 = vadd.f32 %v1163, %v1251
        %v1253 = vpop.f32.mrf.mxu0
        %v1254 = vadd.f32 %v1165, %v1253
        %1255 = vmatmul.bf16.gmra.mxu0 %v748
        %v1256 = vpop.f32.mrf.mxu0
        %v1257 = vadd.f32 %v1168, %v1256
        %v1258 = vpop.f32.mrf.mxu0
        %v1259 = vadd.f32 %v1170, %v1258
        %1260 = vmatmul.bf16.gmra.mxu0 %v752
        %v1261 = vpop.f32.mrf.mxu0
        %v1262 = vadd.f32 %v1173, %v1261
        %v1263 = vpop.f32.mrf.mxu0
        %v1264 = vadd.f32 %v1175, %v1263
        %1265 = vmatmul.bf16.gmra.mxu0 %v756
        %v1266 = vpop.f32.mrf.mxu0
        %v1267 = vadd.f32 %v1178, %v1266
        %v1268 = vpop.f32.mrf.mxu0
        %v1269 = vadd.f32 %v1180, %v1268
        %1270 = vmatmul.bf16.gmra.mxu0 %v760
        %v1271 = vpop.f32.mrf.mxu0
        %v1272 = vadd.f32 %v1183, %v1271
        %v1273 = vpop.f32.mrf.mxu0
        %v1274 = vadd.f32 %v1185, %v1273
        %1275 = vmatmul.bf16.gmra.mxu0 %v764
        %v1276 = vpop.f32.mrf.mxu0
        %v1277 = vadd.f32 %v1188, %v1276
        %v1278 = vpop.f32.mrf.mxu0
        %v1279 = vadd.f32 %v1190, %v1278
        %1280 = vmatmul.bf16.gmra.mxu0 %v768
        %v1281 = vpop.f32.mrf.mxu0
        %v1282 = vadd.f32 %v1193, %v1281
        %v1283 = vpop.f32.mrf.mxu0
        %v1284 = vadd.f32 %v1195, %v1283
        %1285 = vmatmul.bf16.gmra.mxu0 %v772
        %v1286 = vpop.f32.mrf.mxu0
        %v1287 = vadd.f32 %v1198, %v1286
        %v1288 = vpop.f32.mrf.mxu0
        %v1289 = vadd.f32 %v1200, %v1288
        %1290 = vmatmul.bf16.gmra.mxu0 %v776
        %v1291 = vpop.f32.mrf.mxu0
        %v1292 = vadd.f32 %v1203, %v1291
        %v1293 = vpop.f32.mrf.mxu0
        %v1294 = vadd.f32 %v1205, %v1293
        %1295 = vmatmul.bf16.gmra.mxu0 %v780
        %v1296 = vpop.f32.mrf.mxu0
        %v1297 = vadd.f32 %v1208, %v1296
        %v1298 = vpop.f32.mrf.mxu0
        %v1299 = vadd.f32 %v1210, %v1298
        %1300 = vmatmul.bf16.gmra.mxu0 %v784
        %v1301 = vpop.f32.mrf.mxu0
        %v1302 = vadd.f32 %v1213, %v1301
        %v1303 = vpop.f32.mrf.mxu0
        %v1304 = vadd.f32 %v1215, %v1303
        %1305 = vmatmul.bf16.gmra.mxu0 %v788
        %v1306 = vpop.f32.mrf.mxu0
        %v1307 = vadd.f32 %v1218, %v1306
        %v1308 = vpop.f32.mrf.mxu0
        %v1309 = vadd.f32 %v1220, %v1308
        %1310 = vmatmul.bf16.gmra.mxu0 %v792
        %v1311 = vpop.f32.mrf.mxu0
        %v1312 = vadd.f32 %v1223, %v1311
        %v1313 = vpop.f32.mrf.mxu0
        %v1314 = vadd.f32 %v1225, %v1313
        %1315 = vmatmul.bf16.gmra.mxu0 %v796
        %v1316 = vpop.f32.mrf.mxu0
        %v1317 = vadd.f32 %v1228, %v1316
        %v1318 = vpop.f32.mrf.mxu0
        %v1319 = vadd.f32 %v1230, %v1318
        %1320 = vdwg.mxu0
        %1321 = vmatpush.bf16.msra.mxu0 %v1021
        %1322 = vmatpush.bf16.msra.mxu0 %v1020
        %1323 = vmatpush.bf16.msra.mxu0 %v1019
        %1324 = vmatpush.bf16.msra.mxu0 %v1018
        %1325 = vmatpush.bf16.msra.mxu0 %v1017
        %1326 = vmatpush.bf16.msra.mxu0 %v1016
        %1327 = vmatpush.bf16.msra.mxu0 %v1015
        %1328 = vmatpush.bf16.msra.mxu0 %v1014
        %1329 = vmatmul.bf16.gmra.mxu0 %v737
        %v1330 = vpop.f32.mrf.mxu0
        %v1331 = vadd.f32 %v1242, %v1330
        %v1332 = vpop.f32.mrf.mxu0
        %v1333 = vadd.f32 %v1244, %v1332
        %1334 = vmatmul.bf16.gmra.mxu0 %v741
        %v1335 = vpop.f32.mrf.mxu0
        %v1336 = vadd.f32 %v1247, %v1335
        %v1337 = vpop.f32.mrf.mxu0
        %v1338 = vadd.f32 %v1249, %v1337
        %1339 = vmatmul.bf16.gmra.mxu0 %v745
        %v1340 = vpop.f32.mrf.mxu0
        %v1341 = vadd.f32 %v1252, %v1340
        %v1342 = vpop.f32.mrf.mxu0
        %v1343 = vadd.f32 %v1254, %v1342
        %1344 = vmatmul.bf16.gmra.mxu0 %v749
        %v1345 = vpop.f32.mrf.mxu0
        %v1346 = vadd.f32 %v1257, %v1345
        %v1347 = vpop.f32.mrf.mxu0
        %v1348 = vadd.f32 %v1259, %v1347
        %1349 = vmatmul.bf16.gmra.mxu0 %v753
        %v1350 = vpop.f32.mrf.mxu0
        %v1351 = vadd.f32 %v1262, %v1350
        %v1352 = vpop.f32.mrf.mxu0
        %v1353 = vadd.f32 %v1264, %v1352
        %1354 = vmatmul.bf16.gmra.mxu0 %v757
        %v1355 = vpop.f32.mrf.mxu0
        %v1356 = vadd.f32 %v1267, %v1355
        %v1357 = vpop.f32.mrf.mxu0
        %v1358 = vadd.f32 %v1269, %v1357
        %1359 = vmatmul.bf16.gmra.mxu0 %v761
        %v1360 = vpop.f32.mrf.mxu0
        %v1361 = vadd.f32 %v1272, %v1360
        %v1362 = vpop.f32.mrf.mxu0
        %v1363 = vadd.f32 %v1274, %v1362
        %1364 = vmatmul.bf16.gmra.mxu0 %v765
        %v1365 = vpop.f32.mrf.mxu0
        %v1366 = vadd.f32 %v1277, %v1365
        %v1367 = vpop.f32.mrf.mxu0
        %v1368 = vadd.f32 %v1279, %v1367
        %1369 = vmatmul.bf16.gmra.mxu0 %v769
        %v1370 = vpop.f32.mrf.mxu0
        %v1371 = vadd.f32 %v1282, %v1370
        %v1372 = vpop.f32.mrf.mxu0
        %v1373 = vadd.f32 %v1284, %v1372
        %1374 = vmatmul.bf16.gmra.mxu0 %v773
        %v1375 = vpop.f32.mrf.mxu0
        %v1376 = vadd.f32 %v1287, %v1375
        %v1377 = vpop.f32.mrf.mxu0
        %v1378 = vadd.f32 %v1289, %v1377
        %1379 = vmatmul.bf16.gmra.mxu0 %v777
        %v1380 = vpop.f32.mrf.mxu0
        %v1381 = vadd.f32 %v1292, %v1380
        %v1382 = vpop.f32.mrf.mxu0
        %v1383 = vadd.f32 %v1294, %v1382
        %1384 = vmatmul.bf16.gmra.mxu0 %v781
        %v1385 = vpop.f32.mrf.mxu0
        %v1386 = vadd.f32 %v1297, %v1385
        %v1387 = vpop.f32.mrf.mxu0
        %v1388 = vadd.f32 %v1299, %v1387
        %1389 = vmatmul.bf16.gmra.mxu0 %v785
        %v1390 = vpop.f32.mrf.mxu0
        %v1391 = vadd.f32 %v1302, %v1390
        %v1392 = vpop.f32.mrf.mxu0
        %v1393 = vadd.f32 %v1304, %v1392
        %1394 = vmatmul.bf16.gmra.mxu0 %v789
        %v1395 = vpop.f32.mrf.mxu0
        %v1396 = vadd.f32 %v1307, %v1395
        %v1397 = vpop.f32.mrf.mxu0
        %v1398 = vadd.f32 %v1309, %v1397
        %1399 = vmatmul.bf16.gmra.mxu0 %v793
        %v1400 = vpop.f32.mrf.mxu0
        %v1401 = vadd.f32 %v1312, %v1400
        %v1402 = vpop.f32.mrf.mxu0
        %v1403 = vadd.f32 %v1314, %v1402
        %1404 = vmatmul.bf16.gmra.mxu0 %v797
        %v1405 = vpop.f32.mrf.mxu0
        %v1406 = vadd.f32 %v1317, %v1405
        %v1407 = vpop.f32.mrf.mxu0
        %v1408 = vadd.f32 %v1319, %v1407
        %1409 = vdwg.mxu0
        %v1410 = vadd.f32 %v446, %v1331
        %v1411 = vadd.f32 %v447, %v1333
        %v1412 = vadd.f32 %v448, %v1336
        %v1413 = vadd.f32 %v449, %v1338
        %v1414 = vadd.f32 %v450, %v1341
        %v1415 = vadd.f32 %v451, %v1343
        %v1416 = vadd.f32 %v452, %v1346
        %v1417 = vadd.f32 %v453, %v1348
        %v1418 = vadd.f32 %v454, %v1351
        %v1419 = vadd.f32 %v455, %v1353
        %v1420 = vadd.f32 %v456, %v1356
        %v1421 = vadd.f32 %v457, %v1358
        %v1422 = vadd.f32 %v458, %v1361
        %v1423 = vadd.f32 %v459, %v1363
        %v1424 = vadd.f32 %v460, %v1366
        %v1425 = vadd.f32 %v461, %v1368
        %v1426 = vadd.f32 %v462, %v1371
        %v1427 = vadd.f32 %v463, %v1373
        %v1428 = vadd.f32 %v464, %v1376
        %v1429 = vadd.f32 %v465, %v1378
        %v1430 = vadd.f32 %v466, %v1381
        %v1431 = vadd.f32 %v467, %v1383
        %v1432 = vadd.f32 %v468, %v1386
        %v1433 = vadd.f32 %v469, %v1388
        %v1434 = vadd.f32 %v470, %v1391
        %v1435 = vadd.f32 %v471, %v1393
        %v1436 = vadd.f32 %v472, %v1396
        %v1437 = vadd.f32 %v473, %v1398
        %v1438 = vadd.f32 %v474, %v1401
        %v1439 = vadd.f32 %v475, %v1403
        %v1440 = vadd.f32 %v476, %v1406
        %v1441 = vadd.f32 %v477, %v1408
        %1442 = vst [vmem:[#allocation2] sm:$0xff] %v1410
        %1443 = vst [vmem:[#allocation2 + $0x8] sm:$0xff] %v1411
        %1444 = vst [vmem:[#allocation2 + $0x10] sm:$0xff] %v1412
        %1445 = vst [vmem:[#allocation2 + $0x18] sm:$0xff] %v1413
        %1446 = vst [vmem:[#allocation2 + $0x20] sm:$0xff] %v1414
        %1447 = vst [vmem:[#allocation2 + $0x28] sm:$0xff] %v1415
        %1448 = vst [vmem:[#allocation2 + $0x30] sm:$0xff] %v1416
        %1449 = vst [vmem:[#allocation2 + $0x38] sm:$0xff] %v1417
        %1450 = vst [vmem:[#allocation2 + $0x40] sm:$0xff] %v1418
        %1451 = vst [vmem:[#allocation2 + $0x48] sm:$0xff] %v1419
        %1452 = vst [vmem:[#allocation2 + $0x50] sm:$0xff] %v1420
        %1453 = vst [vmem:[#allocation2 + $0x58] sm:$0xff] %v1421
        %1454 = vst [vmem:[#allocation2 + $0x60] sm:$0xff] %v1422
        %1455 = vst [vmem:[#allocation2 + $0x68] sm:$0xff] %v1423
        %1456 = vst [vmem:[#allocation2 + $0x70] sm:$0xff] %v1424
        %1457 = vst [vmem:[#allocation2 + $0x78] sm:$0xff] %v1425
        %1458 = vst [vmem:[#allocation2 + $0x80] sm:$0xff] %v1426
        %1459 = vst [vmem:[#allocation2 + $0x88] sm:$0xff] %v1427
        %1460 = vst [vmem:[#allocation2 + $0x90] sm:$0xff] %v1428
        %1461 = vst [vmem:[#allocation2 + $0x98] sm:$0xff] %v1429
        %1462 = vst [vmem:[#allocation2 + $0xa0] sm:$0xff] %v1430
        %1463 = vst [vmem:[#allocation2 + $0xa8] sm:$0xff] %v1431
        %1464 = vst [vmem:[#allocation2 + $0xb0] sm:$0xff] %v1432
        %1465 = vst [vmem:[#allocation2 + $0xb8] sm:$0xff] %v1433
        %1466 = vst [vmem:[#allocation2 + $0xc0] sm:$0xff] %v1434
        %1467 = vst [vmem:[#allocation2 + $0xc8] sm:$0xff] %v1435
        %1468 = vst [vmem:[#allocation2 + $0xd0] sm:$0xff] %v1436
        %1469 = vst [vmem:[#allocation2 + $0xd8] sm:$0xff] %v1437
        %1470 = vst [vmem:[#allocation2 + $0xe0] sm:$0xff] %v1438
        %1471 = vst [vmem:[#allocation2 + $0xe8] sm:$0xff] %v1439
        %1472 = vst [vmem:[#allocation2 + $0xf0] sm:$0xff] %v1440
        %1473 = vst [vmem:[#allocation2 + $0xf8] sm:$0xff] %v1441
        // Predicated region
        $region57: #{tpu_custom_call.1} parent=47 // pred_check
          %p1474 = pneg %p341
        $region58: #{tpu_custom_call.1} parent=47 // pred_check_branch
          %1476 = sbr.rel (%p1474) target = $region60
        $region59: #{tpu_custom_call.1} parent=47 // pred_region
          %v1477 = vld [vmem:[#allocation2] sm:$0xff]
          %v1478 = vld [vmem:[#allocation2 + $0x8] sm:$0xff]
          %v1479 = vld [vmem:[#allocation2 + $0x10] sm:$0xff]
          %v1480 = vld [vmem:[#allocation2 + $0x18] sm:$0xff]
          %v1481 = vld [vmem:[#allocation2 + $0x20] sm:$0xff]
          %v1482 = vld [vmem:[#allocation2 + $0x28] sm:$0xff]
          %v1483 = vld [vmem:[#allocation2 + $0x30] sm:$0xff]
          %v1484 = vld [vmem:[#allocation2 + $0x38] sm:$0xff]
          %v1485 = vld [vmem:[#allocation2 + $0x40] sm:$0xff]
          %v1486 = vld [vmem:[#allocation2 + $0x48] sm:$0xff]
          %v1487 = vld [vmem:[#allocation2 + $0x50] sm:$0xff]
          %v1488 = vld [vmem:[#allocation2 + $0x58] sm:$0xff]
          %v1489 = vld [vmem:[#allocation2 + $0x60] sm:$0xff]
          %v1490 = vld [vmem:[#allocation2 + $0x68] sm:$0xff]
          %v1491 = vld [vmem:[#allocation2 + $0x70] sm:$0xff]
          %v1492 = vld [vmem:[#allocation2 + $0x78] sm:$0xff]
          %v1493 = vld [vmem:[#allocation2 + $0x80] sm:$0xff]
          %v1494 = vld [vmem:[#allocation2 + $0x88] sm:$0xff]
          %v1495 = vld [vmem:[#allocation2 + $0x90] sm:$0xff]
          %v1496 = vld [vmem:[#allocation2 + $0x98] sm:$0xff]
          %v1497 = vld [vmem:[#allocation2 + $0xa0] sm:$0xff]
          %v1498 = vld [vmem:[#allocation2 + $0xa8] sm:$0xff]
          %v1499 = vld [vmem:[#allocation2 + $0xb0] sm:$0xff]
          %v1500 = vld [vmem:[#allocation2 + $0xb8] sm:$0xff]
          %v1501 = vld [vmem:[#allocation2 + $0xc0] sm:$0xff]
          %v1502 = vld [vmem:[#allocation2 + $0xc8] sm:$0xff]
          %v1503 = vld [vmem:[#allocation2 + $0xd0] sm:$0xff]
          %v1504 = vld [vmem:[#allocation2 + $0xd8] sm:$0xff]
          %v1505 = vld [vmem:[#allocation2 + $0xe0] sm:$0xff]
          %v1506 = vld [vmem:[#allocation2 + $0xe8] sm:$0xff]
          %v1507 = vld [vmem:[#allocation2 + $0xf0] sm:$0xff]
          %v1508 = vld [vmem:[#allocation2 + $0xf8] sm:$0xff]
          %v1509 = vld [vmem:[%s338] sm:$0xff]
          %v1510 = vld [vmem:[%s338 + $0x8] sm:$0xff]
          %v1511 = vld [vmem:[%s338 + $0x10] sm:$0xff]
          %v1512 = vld [vmem:[%s338 + $0x18] sm:$0xff]
          %v1513 = vld [vmem:[%s338 + $0x20] sm:$0xff]
          %v1514 = vld [vmem:[%s338 + $0x28] sm:$0xff]
          %v1515 = vld [vmem:[%s338 + $0x30] sm:$0xff]
          %v1516 = vld [vmem:[%s338 + $0x38] sm:$0xff]
          %v1517 = vld [vmem:[%s338 + $0x40] sm:$0xff]
          %v1518 = vld [vmem:[%s338 + $0x48] sm:$0xff]
          %v1519 = vld [vmem:[%s338 + $0x50] sm:$0xff]
          %v1520 = vld [vmem:[%s338 + $0x58] sm:$0xff]
          %v1521 = vld [vmem:[%s338 + $0x60] sm:$0xff]
          %v1522 = vld [vmem:[%s338 + $0x68] sm:$0xff]
          %v1523 = vld [vmem:[%s338 + $0x70] sm:$0xff]
          %v1524 = vld [vmem:[%s338 + $0x78] sm:$0xff]
          %v1525 = vld [vmem:[%s338 + $0x80] sm:$0xff]
          %v1526 = vld [vmem:[%s338 + $0x88] sm:$0xff]
          %v1527 = vld [vmem:[%s338 + $0x90] sm:$0xff]
          %v1528 = vld [vmem:[%s338 + $0x98] sm:$0xff]
          %v1529 = vld [vmem:[%s338 + $0xa0] sm:$0xff]
          %v1530 = vld [vmem:[%s338 + $0xa8] sm:$0xff]
          %v1531 = vld [vmem:[%s338 + $0xb0] sm:$0xff]
          %v1532 = vld [vmem:[%s338 + $0xb8] sm:$0xff]
          %v1533 = vld [vmem:[%s338 + $0xc0] sm:$0xff]
          %v1534 = vld [vmem:[%s338 + $0xc8] sm:$0xff]
          %v1535 = vld [vmem:[%s338 + $0xd0] sm:$0xff]
          %v1536 = vld [vmem:[%s338 + $0xd8] sm:$0xff]
          %v1537 = vld [vmem:[%s338 + $0xe0] sm:$0xff]
          %v1538 = vld [vmem:[%s338 + $0xe8] sm:$0xff]
          %v1539 = vld [vmem:[%s338 + $0xf0] sm:$0xff]
          %v1540 = vld [vmem:[%s338 + $0xf8] sm:$0xff]
          %1542 = vset.pattern.permute.xlu0 0
          %1543 = vperm.xlu0 %1542, %v1509
          %v1544 = vpop.permute.xlu0 %1543
          %1547 = vset.pattern.permute.xlu0 0
          %1548 = vperm.xlu0 %1547, %v1510
          %v1549 = vpop.permute.xlu0 %1548
          %1552 = vset.pattern.permute.xlu0 0
          %1553 = vperm.xlu0 %1552, %v1511
          %v1554 = vpop.permute.xlu0 %1553
          %1557 = vset.pattern.permute.xlu0 0
          %1558 = vperm.xlu0 %1557, %v1512
          %v1559 = vpop.permute.xlu0 %1558
          %1562 = vset.pattern.permute.xlu0 0
          %1563 = vperm.xlu0 %1562, %v1513
          %v1564 = vpop.permute.xlu0 %1563
          %1567 = vset.pattern.permute.xlu0 0
          %1568 = vperm.xlu0 %1567, %v1514
          %v1569 = vpop.permute.xlu0 %1568
          %1572 = vset.pattern.permute.xlu0 0
          %1573 = vperm.xlu0 %1572, %v1515
          %v1574 = vpop.permute.xlu0 %1573
          %1577 = vset.pattern.permute.xlu0 0
          %1578 = vperm.xlu0 %1577, %v1516
          %v1579 = vpop.permute.xlu0 %1578
          %1582 = vset.pattern.permute.xlu0 0
          %1583 = vperm.xlu0 %1582, %v1517
          %v1584 = vpop.permute.xlu0 %1583
          %1587 = vset.pattern.permute.xlu0 0
          %1588 = vperm.xlu0 %1587, %v1518
          %v1589 = vpop.permute.xlu0 %1588
          %1592 = vset.pattern.permute.xlu0 0
          %1593 = vperm.xlu0 %1592, %v1519
          %v1594 = vpop.permute.xlu0 %1593
          %1597 = vset.pattern.permute.xlu0 0
          %1598 = vperm.xlu0 %1597, %v1520
          %v1599 = vpop.permute.xlu0 %1598
          %1602 = vset.pattern.permute.xlu0 0
          %1603 = vperm.xlu0 %1602, %v1521
          %v1604 = vpop.permute.xlu0 %1603
          %1607 = vset.pattern.permute.xlu0 0
          %1608 = vperm.xlu0 %1607, %v1522
          %v1609 = vpop.permute.xlu0 %1608
          %1612 = vset.pattern.permute.xlu0 0
          %1613 = vperm.xlu0 %1612, %v1523
          %v1614 = vpop.permute.xlu0 %1613
          %1617 = vset.pattern.permute.xlu0 0
          %1618 = vperm.xlu0 %1617, %v1524
          %v1619 = vpop.permute.xlu0 %1618
          %1622 = vset.pattern.permute.xlu0 0
          %1623 = vperm.xlu0 %1622, %v1525
          %v1624 = vpop.permute.xlu0 %1623
          %1627 = vset.pattern.permute.xlu0 0
          %1628 = vperm.xlu0 %1627, %v1526
          %v1629 = vpop.permute.xlu0 %1628
          %1632 = vset.pattern.permute.xlu0 0
          %1633 = vperm.xlu0 %1632, %v1527
          %v1634 = vpop.permute.xlu0 %1633
          %1637 = vset.pattern.permute.xlu0 0
          %1638 = vperm.xlu0 %1637, %v1528
          %v1639 = vpop.permute.xlu0 %1638
          %1642 = vset.pattern.permute.xlu0 0
          %1643 = vperm.xlu0 %1642, %v1529
          %v1644 = vpop.permute.xlu0 %1643
          %1647 = vset.pattern.permute.xlu0 0
          %1648 = vperm.xlu0 %1647, %v1530
          %v1649 = vpop.permute.xlu0 %1648
          %1652 = vset.pattern.permute.xlu0 0
          %1653 = vperm.xlu0 %1652, %v1531
          %v1654 = vpop.permute.xlu0 %1653
          %1657 = vset.pattern.permute.xlu0 0
          %1658 = vperm.xlu0 %1657, %v1532
          %v1659 = vpop.permute.xlu0 %1658
          %1662 = vset.pattern.permute.xlu0 0
          %1663 = vperm.xlu0 %1662, %v1533
          %v1664 = vpop.permute.xlu0 %1663
          %1667 = vset.pattern.permute.xlu0 0
          %1668 = vperm.xlu0 %1667, %v1534
          %v1669 = vpop.permute.xlu0 %1668
          %1672 = vset.pattern.permute.xlu0 0
          %1673 = vperm.xlu0 %1672, %v1535
          %v1674 = vpop.permute.xlu0 %1673
          %1677 = vset.pattern.permute.xlu0 0
          %1678 = vperm.xlu0 %1677, %v1536
          %v1679 = vpop.permute.xlu0 %1678
          %1682 = vset.pattern.permute.xlu0 0
          %1683 = vperm.xlu0 %1682, %v1537
          %v1684 = vpop.permute.xlu0 %1683
          %1687 = vset.pattern.permute.xlu0 0
          %1688 = vperm.xlu0 %1687, %v1538
          %v1689 = vpop.permute.xlu0 %1688
          %1692 = vset.pattern.permute.xlu0 0
          %1693 = vperm.xlu0 %1692, %v1539
          %v1694 = vpop.permute.xlu0 %1693
          %1697 = vset.pattern.permute.xlu0 0
          %1698 = vperm.xlu0 %1697, %v1540
          %v1699 = vpop.permute.xlu0 %1698
          %v1701 = vmul.f32 %v1477, %v1544
          %v1702 = vmul.f32 %v1478, %v1549
          %v1703 = vmul.f32 %v1479, %v1554
          %v1704 = vmul.f32 %v1480, %v1559
          %v1705 = vmul.f32 %v1481, %v1564
          %v1706 = vmul.f32 %v1482, %v1569
          %v1707 = vmul.f32 %v1483, %v1574
          %v1708 = vmul.f32 %v1484, %v1579
          %v1709 = vmul.f32 %v1485, %v1584
          %v1710 = vmul.f32 %v1486, %v1589
          %v1711 = vmul.f32 %v1487, %v1594
          %v1712 = vmul.f32 %v1488, %v1599
          %v1713 = vmul.f32 %v1489, %v1604
          %v1714 = vmul.f32 %v1490, %v1609
          %v1715 = vmul.f32 %v1491, %v1614
          %v1716 = vmul.f32 %v1492, %v1619
          %v1717 = vmul.f32 %v1493, %v1624
          %v1718 = vmul.f32 %v1494, %v1629
          %v1719 = vmul.f32 %v1495, %v1634
          %v1720 = vmul.f32 %v1496, %v1639
          %v1721 = vmul.f32 %v1497, %v1644
          %v1722 = vmul.f32 %v1498, %v1649
          %v1723 = vmul.f32 %v1499, %v1654
          %v1724 = vmul.f32 %v1500, %v1659
          %v1725 = vmul.f32 %v1501, %v1664
          %v1726 = vmul.f32 %v1502, %v1669
          %v1727 = vmul.f32 %v1503, %v1674
          %v1728 = vmul.f32 %v1504, %v1679
          %v1729 = vmul.f32 %v1505, %v1684
          %v1730 = vmul.f32 %v1506, %v1689
          %v1731 = vmul.f32 %v1507, %v1694
          %v1732 = vmul.f32 %v1508, %v1699
          %v1733 = vpack.c.bf16 %v1702, %v1701
          %v1734 = vpack.c.bf16 %v1704, %v1703
          %v1735 = vpack.c.bf16 %v1706, %v1705
          %v1736 = vpack.c.bf16 %v1708, %v1707
          %v1737 = vpack.c.bf16 %v1710, %v1709
          %v1738 = vpack.c.bf16 %v1712, %v1711
          %v1739 = vpack.c.bf16 %v1714, %v1713
          %v1740 = vpack.c.bf16 %v1716, %v1715
          %v1741 = vpack.c.bf16 %v1718, %v1717
          %v1742 = vpack.c.bf16 %v1720, %v1719
          %v1743 = vpack.c.bf16 %v1722, %v1721
          %v1744 = vpack.c.bf16 %v1724, %v1723
          %v1745 = vpack.c.bf16 %v1726, %v1725
          %v1746 = vpack.c.bf16 %v1728, %v1727
          %v1747 = vpack.c.bf16 %v1730, %v1729
          %v1748 = vpack.c.bf16 %v1732, %v1731
          %v1749 = vld [vmem:[%s3] sm:$0xf]
          %v1750 = vld [vmem:[%s3 + $0x4] sm:$0xf]
          %v1751 = vld [vmem:[%s3 + $0x8] sm:$0xf]
          %v1752 = vld [vmem:[%s3 + $0xc] sm:$0xf]
          %v1753 = vld [vmem:[%s3 + $0x10] sm:$0xf]
          %v1754 = vld [vmem:[%s3 + $0x14] sm:$0xf]
          %v1755 = vld [vmem:[%s3 + $0x18] sm:$0xf]
          %v1756 = vld [vmem:[%s3 + $0x1c] sm:$0xf]
          %v1757 = vld [vmem:[%s3 + $0x20] sm:$0xf]
          %v1758 = vld [vmem:[%s3 + $0x24] sm:$0xf]
          %v1759 = vld [vmem:[%s3 + $0x28] sm:$0xf]
          %v1760 = vld [vmem:[%s3 + $0x2c] sm:$0xf]
          %v1761 = vld [vmem:[%s3 + $0x30] sm:$0xf]
          %v1762 = vld [vmem:[%s3 + $0x34] sm:$0xf]
          %v1763 = vld [vmem:[%s3 + $0x38] sm:$0xf]
          %v1764 = vld [vmem:[%s3 + $0x3c] sm:$0xf]
          %v1765 = vld [vmem:[%s4] sm:$0x1]
          %v1767 = vperm.slane %v1765, 0
          %v1785 = vunpack.c.l.b16 %v1749
          %v1786 = vunpack.c.l.b16 %v1750
          %v1787 = vunpack.c.l.b16 %v1751
          %v1788 = vunpack.c.l.b16 %v1752
          %v1789 = vunpack.c.l.b16 %v1753
          %v1790 = vunpack.c.l.b16 %v1754
          %v1791 = vunpack.c.l.b16 %v1755
          %v1792 = vunpack.c.l.b16 %v1756
          %v1793 = vunpack.c.l.b16 %v1757
          %v1794 = vunpack.c.l.b16 %v1758
          %v1795 = vunpack.c.l.b16 %v1759
          %v1796 = vunpack.c.l.b16 %v1760
          %v1797 = vunpack.c.l.b16 %v1761
          %v1798 = vunpack.c.l.b16 %v1762
          %v1799 = vunpack.c.l.b16 %v1763
          %v1800 = vunpack.c.l.b16 %v1764
          %v1801 = vpack.c.b16 %v1786, %v1785
          %v1802 = vpack.c.b16 %v1788, %v1787
          %v1803 = vpack.c.b16 %v1790, %v1789
          %v1804 = vpack.c.b16 %v1792, %v1791
          %v1805 = vpack.c.b16 %v1794, %v1793
          %v1806 = vpack.c.b16 %v1796, %v1795
          %v1807 = vpack.c.b16 %v1798, %v1797
          %v1808 = vpack.c.b16 %v1800, %v1799
          %1817 = vmatpush.bf16.msra.mxu0 %v1808
          %1818 = vmatpush.bf16.msra.mxu0 %v1807
          %1819 = vmatpush.bf16.msra.mxu0 %v1806
          %1820 = vmatpush.bf16.msra.mxu0 %v1805
          %1821 = vmatpush.bf16.msra.mxu0 %v1804
          %1822 = vmatpush.bf16.msra.mxu0 %v1803
          %1823 = vmatpush.bf16.msra.mxu0 %v1802
          %1824 = vmatpush.bf16.msra.mxu0 %v1801
          %1825 = vmatmul.bf16.gmra.mxu0 %v1733
          %v1826 = vpop.f32.mrf.mxu0
          %v1827 = vadd.f32 %v1767, %v1826
          %v1828 = vpop.f32.mrf.mxu0
          %v1829 = vadd.f32 %v1767, %v1828
          %1830 = vmatmul.bf16.gmra.mxu0 %v1734
          %v1831 = vpop.f32.mrf.mxu0
          %v1832 = vadd.f32 %v1767, %v1831
          %v1833 = vpop.f32.mrf.mxu0
          %v1834 = vadd.f32 %v1767, %v1833
          %1835 = vmatmul.bf16.gmra.mxu0 %v1735
          %v1836 = vpop.f32.mrf.mxu0
          %v1837 = vadd.f32 %v1767, %v1836
          %v1838 = vpop.f32.mrf.mxu0
          %v1839 = vadd.f32 %v1767, %v1838
          %1840 = vmatmul.bf16.gmra.mxu0 %v1736
          %v1841 = vpop.f32.mrf.mxu0
          %v1842 = vadd.f32 %v1767, %v1841
          %v1843 = vpop.f32.mrf.mxu0
          %v1844 = vadd.f32 %v1767, %v1843
          %1845 = vmatmul.bf16.gmra.mxu0 %v1737
          %v1846 = vpop.f32.mrf.mxu0
          %v1847 = vadd.f32 %v1767, %v1846
          %v1848 = vpop.f32.mrf.mxu0
          %v1849 = vadd.f32 %v1767, %v1848
          %1850 = vmatmul.bf16.gmra.mxu0 %v1738
          %v1851 = vpop.f32.mrf.mxu0
          %v1852 = vadd.f32 %v1767, %v1851
          %v1853 = vpop.f32.mrf.mxu0
          %v1854 = vadd.f32 %v1767, %v1853
          %1855 = vmatmul.bf16.gmra.mxu0 %v1739
          %v1856 = vpop.f32.mrf.mxu0
          %v1857 = vadd.f32 %v1767, %v1856
          %v1858 = vpop.f32.mrf.mxu0
          %v1859 = vadd.f32 %v1767, %v1858
          %1860 = vmatmul.bf16.gmra.mxu0 %v1740
          %v1861 = vpop.f32.mrf.mxu0
          %v1862 = vadd.f32 %v1767, %v1861
          %v1863 = vpop.f32.mrf.mxu0
          %v1864 = vadd.f32 %v1767, %v1863
          %1865 = vmatmul.bf16.gmra.mxu0 %v1741
          %v1866 = vpop.f32.mrf.mxu0
          %v1867 = vadd.f32 %v1767, %v1866
          %v1868 = vpop.f32.mrf.mxu0
          %v1869 = vadd.f32 %v1767, %v1868
          %1870 = vmatmul.bf16.gmra.mxu0 %v1742
          %v1871 = vpop.f32.mrf.mxu0
          %v1872 = vadd.f32 %v1767, %v1871
          %v1873 = vpop.f32.mrf.mxu0
          %v1874 = vadd.f32 %v1767, %v1873
          %1875 = vmatmul.bf16.gmra.mxu0 %v1743
          %v1876 = vpop.f32.mrf.mxu0
          %v1877 = vadd.f32 %v1767, %v1876
          %v1878 = vpop.f32.mrf.mxu0
          %v1879 = vadd.f32 %v1767, %v1878
          %1880 = vmatmul.bf16.gmra.mxu0 %v1744
          %v1881 = vpop.f32.mrf.mxu0
          %v1882 = vadd.f32 %v1767, %v1881
          %v1883 = vpop.f32.mrf.mxu0
          %v1884 = vadd.f32 %v1767, %v1883
          %1885 = vmatmul.bf16.gmra.mxu0 %v1745
          %v1886 = vpop.f32.mrf.mxu0
          %v1887 = vadd.f32 %v1767, %v1886
          %v1888 = vpop.f32.mrf.mxu0
          %v1889 = vadd.f32 %v1767, %v1888
          %1890 = vmatmul.bf16.gmra.mxu0 %v1746
          %v1891 = vpop.f32.mrf.mxu0
          %v1892 = vadd.f32 %v1767, %v1891
          %v1893 = vpop.f32.mrf.mxu0
          %v1894 = vadd.f32 %v1767, %v1893
          %1895 = vmatmul.bf16.gmra.mxu0 %v1747
          %v1896 = vpop.f32.mrf.mxu0
          %v1897 = vadd.f32 %v1767, %v1896
          %v1898 = vpop.f32.mrf.mxu0
          %v1899 = vadd.f32 %v1767, %v1898
          %1900 = vmatmul.bf16.gmra.mxu0 %v1748
          %v1901 = vpop.f32.mrf.mxu0
          %v1902 = vadd.f32 %v1767, %v1901
          %v1903 = vpop.f32.mrf.mxu0
          %v1904 = vadd.f32 %v1767, %v1903
          %1905 = vdwg.mxu0
          %v1906 = vmul.f32 %v1827, %v1827
          %v1907 = vmul.f32 %v1829, %v1829
          %v1908 = vmul.f32 %v1832, %v1832
          %v1909 = vmul.f32 %v1834, %v1834
          %v1910 = vmul.f32 %v1837, %v1837
          %v1911 = vmul.f32 %v1839, %v1839
          %v1912 = vmul.f32 %v1842, %v1842
          %v1913 = vmul.f32 %v1844, %v1844
          %v1914 = vmul.f32 %v1847, %v1847
          %v1915 = vmul.f32 %v1849, %v1849
          %v1916 = vmul.f32 %v1852, %v1852
          %v1917 = vmul.f32 %v1854, %v1854
          %v1918 = vmul.f32 %v1857, %v1857
          %v1919 = vmul.f32 %v1859, %v1859
          %v1920 = vmul.f32 %v1862, %v1862
          %v1921 = vmul.f32 %v1864, %v1864
          %v1922 = vmul.f32 %v1867, %v1867
          %v1923 = vmul.f32 %v1869, %v1869
          %v1924 = vmul.f32 %v1872, %v1872
          %v1925 = vmul.f32 %v1874, %v1874
          %v1926 = vmul.f32 %v1877, %v1877
          %v1927 = vmul.f32 %v1879, %v1879
          %v1928 = vmul.f32 %v1882, %v1882
          %v1929 = vmul.f32 %v1884, %v1884
          %v1930 = vmul.f32 %v1887, %v1887
          %v1931 = vmul.f32 %v1889, %v1889
          %v1932 = vmul.f32 %v1892, %v1892
          %v1933 = vmul.f32 %v1894, %v1894
          %v1934 = vmul.f32 %v1897, %v1897
          %v1935 = vmul.f32 %v1899, %v1899
          %v1936 = vmul.f32 %v1902, %v1902
          %v1937 = vmul.f32 %v1904, %v1904
          %v1938 = vmul.f32 %v1827, %v1906
          %v1939 = vmul.f32 %v1829, %v1907
          %v1940 = vmul.f32 %v1832, %v1908
          %v1941 = vmul.f32 %v1834, %v1909
          %v1942 = vmul.f32 %v1837, %v1910
          %v1943 = vmul.f32 %v1839, %v1911
          %v1944 = vmul.f32 %v1842, %v1912
          %v1945 = vmul.f32 %v1844, %v1913
          %v1946 = vmul.f32 %v1847, %v1914
          %v1947 = vmul.f32 %v1849, %v1915
          %v1948 = vmul.f32 %v1852, %v1916
          %v1949 = vmul.f32 %v1854, %v1917
          %v1950 = vmul.f32 %v1857, %v1918
          %v1951 = vmul.f32 %v1859, %v1919
          %v1952 = vmul.f32 %v1862, %v1920
          %v1953 = vmul.f32 %v1864, %v1921
          %v1954 = vmul.f32 %v1867, %v1922
          %v1955 = vmul.f32 %v1869, %v1923
          %v1956 = vmul.f32 %v1872, %v1924
          %v1957 = vmul.f32 %v1874, %v1925
          %v1958 = vmul.f32 %v1877, %v1926
          %v1959 = vmul.f32 %v1879, %v1927
          %v1960 = vmul.f32 %v1882, %v1928
          %v1961 = vmul.f32 %v1884, %v1929
          %v1962 = vmul.f32 %v1887, %v1930
          %v1963 = vmul.f32 %v1889, %v1931
          %v1964 = vmul.f32 %v1892, %v1932
          %v1965 = vmul.f32 %v1894, %v1933
          %v1966 = vmul.f32 %v1897, %v1934
          %v1967 = vmul.f32 %v1899, %v1935
          %v1968 = vmul.f32 %v1902, %v1936
          %v1969 = vmul.f32 %v1904, %v1937
          %v1970 = vmul.f32 %v1938, 0.044715
          %v1971 = vmul.f32 %v1939, 0.044715
          %v1972 = vmul.f32 %v1940, 0.044715
          %v1973 = vmul.f32 %v1941, 0.044715
          %v1974 = vmul.f32 %v1942, 0.044715
          %v1975 = vmul.f32 %v1943, 0.044715
          %v1976 = vmul.f32 %v1944, 0.044715
          %v1977 = vmul.f32 %v1945, 0.044715
          %v1978 = vmul.f32 %v1946, 0.044715
          %v1979 = vmul.f32 %v1947, 0.044715
          %v1980 = vmul.f32 %v1948, 0.044715
          %v1981 = vmul.f32 %v1949, 0.044715
          %v1982 = vmul.f32 %v1950, 0.044715
          %v1983 = vmul.f32 %v1951, 0.044715
          %v1984 = vmul.f32 %v1952, 0.044715
          %v1985 = vmul.f32 %v1953, 0.044715
          %v1986 = vmul.f32 %v1954, 0.044715
          %v1987 = vmul.f32 %v1955, 0.044715
          %v1988 = vmul.f32 %v1956, 0.044715
          %v1989 = vmul.f32 %v1957, 0.044715
          %v1990 = vmul.f32 %v1958, 0.044715
          %v1991 = vmul.f32 %v1959, 0.044715
          %v1992 = vmul.f32 %v1960, 0.044715
          %v1993 = vmul.f32 %v1961, 0.044715
          %v1994 = vmul.f32 %v1962, 0.044715
          %v1995 = vmul.f32 %v1963, 0.044715
          %v1996 = vmul.f32 %v1964, 0.044715
          %v1997 = vmul.f32 %v1965, 0.044715
          %v1998 = vmul.f32 %v1966, 0.044715
          %v1999 = vmul.f32 %v1967, 0.044715
          %v2000 = vmul.f32 %v1968, 0.044715
          %v2001 = vmul.f32 %v1969, 0.044715
          %v2002 = vadd.f32 %v1827, %v1970
          %v2003 = vadd.f32 %v1829, %v1971
          %v2004 = vadd.f32 %v1832, %v1972
          %v2005 = vadd.f32 %v1834, %v1973
          %v2006 = vadd.f32 %v1837, %v1974
          %v2007 = vadd.f32 %v1839, %v1975
          %v2008 = vadd.f32 %v1842, %v1976
          %v2009 = vadd.f32 %v1844, %v1977
          %v2010 = vadd.f32 %v1847, %v1978
          %v2011 = vadd.f32 %v1849, %v1979
          %v2012 = vadd.f32 %v1852, %v1980
          %v2013 = vadd.f32 %v1854, %v1981
          %v2014 = vadd.f32 %v1857, %v1982
          %v2015 = vadd.f32 %v1859, %v1983
          %v2016 = vadd.f32 %v1862, %v1984
          %v2017 = vadd.f32 %v1864, %v1985
          %v2018 = vadd.f32 %v1867, %v1986
          %v2019 = vadd.f32 %v1869, %v1987
          %v2020 = vadd.f32 %v1872, %v1988
          %v2021 = vadd.f32 %v1874, %v1989
          %v2022 = vadd.f32 %v1877, %v1990
          %v2023 = vadd.f32 %v1879, %v1991
          %v2024 = vadd.f32 %v1882, %v1992
          %v2025 = vadd.f32 %v1884, %v1993
          %v2026 = vadd.f32 %v1887, %v1994
          %v2027 = vadd.f32 %v1889, %v1995
          %v2028 = vadd.f32 %v1892, %v1996
          %v2029 = vadd.f32 %v1894, %v1997
          %v2030 = vadd.f32 %v1897, %v1998
          %v2031 = vadd.f32 %v1899, %v1999
          %v2032 = vadd.f32 %v1902, %v2000
          %v2033 = vadd.f32 %v1904, %v2001
          %v2034 = vmul.f32 %v2002, 0.7978846
          %v2035 = vmul.f32 %v2003, 0.7978846
          %v2036 = vmul.f32 %v2004, 0.7978846
          %v2037 = vmul.f32 %v2005, 0.7978846
          %v2038 = vmul.f32 %v2006, 0.7978846
          %v2039 = vmul.f32 %v2007, 0.7978846
          %v2040 = vmul.f32 %v2008, 0.7978846
          %v2041 = vmul.f32 %v2009, 0.7978846
          %v2042 = vmul.f32 %v2010, 0.7978846
          %v2043 = vmul.f32 %v2011, 0.7978846
          %v2044 = vmul.f32 %v2012, 0.7978846
          %v2045 = vmul.f32 %v2013, 0.7978846
          %v2046 = vmul.f32 %v2014, 0.7978846
          %v2047 = vmul.f32 %v2015, 0.7978846
          %v2048 = vmul.f32 %v2016, 0.7978846
          %v2049 = vmul.f32 %v2017, 0.7978846
          %v2050 = vmul.f32 %v2018, 0.7978846
          %v2051 = vmul.f32 %v2019, 0.7978846
          %v2052 = vmul.f32 %v2020, 0.7978846
          %v2053 = vmul.f32 %v2021, 0.7978846
          %v2054 = vmul.f32 %v2022, 0.7978846
          %v2055 = vmul.f32 %v2023, 0.7978846
          %v2056 = vmul.f32 %v2024, 0.7978846
          %v2057 = vmul.f32 %v2025, 0.7978846
          %v2058 = vmul.f32 %v2026, 0.7978846
          %v2059 = vmul.f32 %v2027, 0.7978846
          %v2060 = vmul.f32 %v2028, 0.7978846
          %v2061 = vmul.f32 %v2029, 0.7978846
          %v2062 = vmul.f32 %v2030, 0.7978846
          %v2063 = vmul.f32 %v2031, 0.7978846
          %v2064 = vmul.f32 %v2032, 0.7978846
          %v2065 = vmul.f32 %v2033, 0.7978846
          %v2066 = vtanh.pop %v2034
          %v2067 = vtanh.pop %v2035
          %v2068 = vtanh.pop %v2036
          %v2069 = vtanh.pop %v2037
          %v2070 = vtanh.pop %v2038
          %v2071 = vtanh.pop %v2039
          %v2072 = vtanh.pop %v2040
          %v2073 = vtanh.pop %v2041
          %v2074 = vtanh.pop %v2042
          %v2075 = vtanh.pop %v2043
          %v2076 = vtanh.pop %v2044
          %v2077 = vtanh.pop %v2045
          %v2078 = vtanh.pop %v2046
          %v2079 = vtanh.pop %v2047
          %v2080 = vtanh.pop %v2048
          %v2081 = vtanh.pop %v2049
          %v2082 = vtanh.pop %v2050
          %v2083 = vtanh.pop %v2051
          %v2084 = vtanh.pop %v2052
          %v2085 = vtanh.pop %v2053
          %v2086 = vtanh.pop %v2054
          %v2087 = vtanh.pop %v2055
          %v2088 = vtanh.pop %v2056
          %v2089 = vtanh.pop %v2057
          %v2090 = vtanh.pop %v2058
          %v2091 = vtanh.pop %v2059
          %v2092 = vtanh.pop %v2060
          %v2093 = vtanh.pop %v2061
          %v2094 = vtanh.pop %v2062
          %v2095 = vtanh.pop %v2063
          %v2096 = vtanh.pop %v2064
          %v2097 = vtanh.pop %v2065
          %v2098 = vadd.f32 %v2066, 1.0
          %v2099 = vadd.f32 %v2067, 1.0
          %v2100 = vadd.f32 %v2068, 1.0
          %v2101 = vadd.f32 %v2069, 1.0
          %v2102 = vadd.f32 %v2070, 1.0
          %v2103 = vadd.f32 %v2071, 1.0
          %v2104 = vadd.f32 %v2072, 1.0
          %v2105 = vadd.f32 %v2073, 1.0
          %v2106 = vadd.f32 %v2074, 1.0
          %v2107 = vadd.f32 %v2075, 1.0
          %v2108 = vadd.f32 %v2076, 1.0
          %v2109 = vadd.f32 %v2077, 1.0
          %v2110 = vadd.f32 %v2078, 1.0
          %v2111 = vadd.f32 %v2079, 1.0
          %v2112 = vadd.f32 %v2080, 1.0
          %v2113 = vadd.f32 %v2081, 1.0
          %v2114 = vadd.f32 %v2082, 1.0
          %v2115 = vadd.f32 %v2083, 1.0
          %v2116 = vadd.f32 %v2084, 1.0
          %v2117 = vadd.f32 %v2085, 1.0
          %v2118 = vadd.f32 %v2086, 1.0
          %v2119 = vadd.f32 %v2087, 1.0
          %v2120 = vadd.f32 %v2088, 1.0
          %v2121 = vadd.f32 %v2089, 1.0
          %v2122 = vadd.f32 %v2090, 1.0
          %v2123 = vadd.f32 %v2091, 1.0
          %v2124 = vadd.f32 %v2092, 1.0
          %v2125 = vadd.f32 %v2093, 1.0
          %v2126 = vadd.f32 %v2094, 1.0
          %v2127 = vadd.f32 %v2095, 1.0
          %v2128 = vadd.f32 %v2096, 1.0
          %v2129 = vadd.f32 %v2097, 1.0
          %v2130 = vmul.f32 %v2098, 0.5
          %v2131 = vmul.f32 %v2099, 0.5
          %v2132 = vmul.f32 %v2100, 0.5
          %v2133 = vmul.f32 %v2101, 0.5
          %v2134 = vmul.f32 %v2102, 0.5
          %v2135 = vmul.f32 %v2103, 0.5
          %v2136 = vmul.f32 %v2104, 0.5
          %v2137 = vmul.f32 %v2105, 0.5
          %v2138 = vmul.f32 %v2106, 0.5
          %v2139 = vmul.f32 %v2107, 0.5
          %v2140 = vmul.f32 %v2108, 0.5
          %v2141 = vmul.f32 %v2109, 0.5
          %v2142 = vmul.f32 %v2110, 0.5
          %v2143 = vmul.f32 %v2111, 0.5
          %v2144 = vmul.f32 %v2112, 0.5
          %v2145 = vmul.f32 %v2113, 0.5
          %v2146 = vmul.f32 %v2114, 0.5
          %v2147 = vmul.f32 %v2115, 0.5
          %v2148 = vmul.f32 %v2116, 0.5
          %v2149 = vmul.f32 %v2117, 0.5
          %v2150 = vmul.f32 %v2118, 0.5
          %v2151 = vmul.f32 %v2119, 0.5
          %v2152 = vmul.f32 %v2120, 0.5
          %v2153 = vmul.f32 %v2121, 0.5
          %v2154 = vmul.f32 %v2122, 0.5
          %v2155 = vmul.f32 %v2123, 0.5
          %v2156 = vmul.f32 %v2124, 0.5
          %v2157 = vmul.f32 %v2125, 0.5
          %v2158 = vmul.f32 %v2126, 0.5
          %v2159 = vmul.f32 %v2127, 0.5
          %v2160 = vmul.f32 %v2128, 0.5
          %v2161 = vmul.f32 %v2129, 0.5
          %v2162 = vmul.f32 %v1827, %v2130
          %v2163 = vmul.f32 %v1829, %v2131
          %v2164 = vmul.f32 %v1832, %v2132
          %v2165 = vmul.f32 %v1834, %v2133
          %v2166 = vmul.f32 %v1837, %v2134
          %v2167 = vmul.f32 %v1839, %v2135
          %v2168 = vmul.f32 %v1842, %v2136
          %v2169 = vmul.f32 %v1844, %v2137
          %v2170 = vmul.f32 %v1847, %v2138
          %v2171 = vmul.f32 %v1849, %v2139
          %v2172 = vmul.f32 %v1852, %v2140
          %v2173 = vmul.f32 %v1854, %v2141
          %v2174 = vmul.f32 %v1857, %v2142
          %v2175 = vmul.f32 %v1859, %v2143
          %v2176 = vmul.f32 %v1862, %v2144
          %v2177 = vmul.f32 %v1864, %v2145
          %v2178 = vmul.f32 %v1867, %v2146
          %v2179 = vmul.f32 %v1869, %v2147
          %v2180 = vmul.f32 %v1872, %v2148
          %v2181 = vmul.f32 %v1874, %v2149
          %v2182 = vmul.f32 %v1877, %v2150
          %v2183 = vmul.f32 %v1879, %v2151
          %v2184 = vmul.f32 %v1882, %v2152
          %v2185 = vmul.f32 %v1884, %v2153
          %v2186 = vmul.f32 %v1887, %v2154
          %v2187 = vmul.f32 %v1889, %v2155
          %v2188 = vmul.f32 %v1892, %v2156
          %v2189 = vmul.f32 %v1894, %v2157
          %v2190 = vmul.f32 %v1897, %v2158
          %v2191 = vmul.f32 %v1899, %v2159
          %v2192 = vmul.f32 %v1902, %v2160
          %v2193 = vmul.f32 %v1904, %v2161
          %v2194 = vpack.c.bf16 %v2163, %v2162
          %v2195 = vpack.c.bf16 %v2165, %v2164
          %v2196 = vpack.c.bf16 %v2167, %v2166
          %v2197 = vpack.c.bf16 %v2169, %v2168
          %v2198 = vpack.c.bf16 %v2171, %v2170
          %v2199 = vpack.c.bf16 %v2173, %v2172
          %v2200 = vpack.c.bf16 %v2175, %v2174
          %v2201 = vpack.c.bf16 %v2177, %v2176
          %v2202 = vpack.c.bf16 %v2179, %v2178
          %v2203 = vpack.c.bf16 %v2181, %v2180
          %v2204 = vpack.c.bf16 %v2183, %v2182
          %v2205 = vpack.c.bf16 %v2185, %v2184
          %v2206 = vpack.c.bf16 %v2187, %v2186
          %v2207 = vpack.c.bf16 %v2189, %v2188
          %v2208 = vpack.c.bf16 %v2191, %v2190
          %v2209 = vpack.c.bf16 %v2193, %v2192
          %v2210 = vld [vmem:[%s5] sm:$0xf]
          %v2211 = vld [vmem:[%s5 + $0x4] sm:$0xf]
          %v2212 = vld [vmem:[%s5 + $0x8] sm:$0xf]
          %v2213 = vld [vmem:[%s5 + $0xc] sm:$0xf]
          %v2214 = vld [vmem:[%s5 + $0x10] sm:$0xf]
          %v2215 = vld [vmem:[%s5 + $0x14] sm:$0xf]
          %v2216 = vld [vmem:[%s5 + $0x18] sm:$0xf]
          %v2217 = vld [vmem:[%s5 + $0x1c] sm:$0xf]
          %v2218 = vld [vmem:[%s5 + $0x20] sm:$0xf]
          %v2219 = vld [vmem:[%s5 + $0x24] sm:$0xf]
          %v2220 = vld [vmem:[%s5 + $0x28] sm:$0xf]
          %v2221 = vld [vmem:[%s5 + $0x2c] sm:$0xf]
          %v2222 = vld [vmem:[%s5 + $0x30] sm:$0xf]
          %v2223 = vld [vmem:[%s5 + $0x34] sm:$0xf]
          %v2224 = vld [vmem:[%s5 + $0x38] sm:$0xf]
          %v2225 = vld [vmem:[%s5 + $0x3c] sm:$0xf]
          %v2226 = vld [vmem:[%s6] sm:$0x1]
          %v2228 = vperm.slane %v2226, 0
          %v2246 = vunpack.c.l.b16 %v2210
          %v2247 = vunpack.c.l.b16 %v2211
          %v2248 = vunpack.c.l.b16 %v2212
          %v2249 = vunpack.c.l.b16 %v2213
          %v2250 = vunpack.c.l.b16 %v2214
          %v2251 = vunpack.c.l.b16 %v2215
          %v2252 = vunpack.c.l.b16 %v2216
          %v2253 = vunpack.c.l.b16 %v2217
          %v2254 = vunpack.c.l.b16 %v2218
          %v2255 = vunpack.c.l.b16 %v2219
          %v2256 = vunpack.c.l.b16 %v2220
          %v2257 = vunpack.c.l.b16 %v2221
          %v2258 = vunpack.c.l.b16 %v2222
          %v2259 = vunpack.c.l.b16 %v2223
          %v2260 = vunpack.c.l.b16 %v2224
          %v2261 = vunpack.c.l.b16 %v2225
          %v2262 = vpack.c.b16 %v2247, %v2246
          %v2263 = vpack.c.b16 %v2249, %v2248
          %v2264 = vpack.c.b16 %v2251, %v2250
          %v2265 = vpack.c.b16 %v2253, %v2252
          %v2266 = vpack.c.b16 %v2255, %v2254
          %v2267 = vpack.c.b16 %v2257, %v2256
          %v2268 = vpack.c.b16 %v2259, %v2258
          %v2269 = vpack.c.b16 %v2261, %v2260
          %2278 = vmatpush.bf16.msra.mxu0 %v2269
          %2279 = vmatpush.bf16.msra.mxu0 %v2268
          %2280 = vmatpush.bf16.msra.mxu0 %v2267
          %2281 = vmatpush.bf16.msra.mxu0 %v2266
          %2282 = vmatpush.bf16.msra.mxu0 %v2265
          %2283 = vmatpush.bf16.msra.mxu0 %v2264
          %2284 = vmatpush.bf16.msra.mxu0 %v2263
          %2285 = vmatpush.bf16.msra.mxu0 %v2262
          %2286 = vmatmul.bf16.gmra.mxu0 %v2194
          %v2287 = vpop.f32.mrf.mxu0
          %v2288 = vadd.f32 %v2228, %v2287
          %v2289 = vpop.f32.mrf.mxu0
          %v2290 = vadd.f32 %v2228, %v2289
          %2291 = vmatmul.bf16.gmra.mxu0 %v2195
          %v2292 = vpop.f32.mrf.mxu0
          %v2293 = vadd.f32 %v2228, %v2292
          %v2294 = vpop.f32.mrf.mxu0
          %v2295 = vadd.f32 %v2228, %v2294
          %2296 = vmatmul.bf16.gmra.mxu0 %v2196
          %v2297 = vpop.f32.mrf.mxu0
          %v2298 = vadd.f32 %v2228, %v2297
          %v2299 = vpop.f32.mrf.mxu0
          %v2300 = vadd.f32 %v2228, %v2299
          %2301 = vmatmul.bf16.gmra.mxu0 %v2197
          %v2302 = vpop.f32.mrf.mxu0
          %v2303 = vadd.f32 %v2228, %v2302
          %v2304 = vpop.f32.mrf.mxu0
          %v2305 = vadd.f32 %v2228, %v2304
          %2306 = vmatmul.bf16.gmra.mxu0 %v2198
          %v2307 = vpop.f32.mrf.mxu0
          %v2308 = vadd.f32 %v2228, %v2307
          %v2309 = vpop.f32.mrf.mxu0
          %v2310 = vadd.f32 %v2228, %v2309
          %2311 = vmatmul.bf16.gmra.mxu0 %v2199
          %v2312 = vpop.f32.mrf.mxu0
          %v2313 = vadd.f32 %v2228, %v2312
          %v2314 = vpop.f32.mrf.mxu0
          %v2315 = vadd.f32 %v2228, %v2314
          %2316 = vmatmul.bf16.gmra.mxu0 %v2200
          %v2317 = vpop.f32.mrf.mxu0
          %v2318 = vadd.f32 %v2228, %v2317
          %v2319 = vpop.f32.mrf.mxu0
          %v2320 = vadd.f32 %v2228, %v2319
          %2321 = vmatmul.bf16.gmra.mxu0 %v2201
          %v2322 = vpop.f32.mrf.mxu0
          %v2323 = vadd.f32 %v2228, %v2322
          %v2324 = vpop.f32.mrf.mxu0
          %v2325 = vadd.f32 %v2228, %v2324
          %2326 = vmatmul.bf16.gmra.mxu0 %v2202
          %v2327 = vpop.f32.mrf.mxu0
          %v2328 = vadd.f32 %v2228, %v2327
          %v2329 = vpop.f32.mrf.mxu0
          %v2330 = vadd.f32 %v2228, %v2329
          %2331 = vmatmul.bf16.gmra.mxu0 %v2203
          %v2332 = vpop.f32.mrf.mxu0
          %v2333 = vadd.f32 %v2228, %v2332
          %v2334 = vpop.f32.mrf.mxu0
          %v2335 = vadd.f32 %v2228, %v2334
          %2336 = vmatmul.bf16.gmra.mxu0 %v2204
          %v2337 = vpop.f32.mrf.mxu0
          %v2338 = vadd.f32 %v2228, %v2337
          %v2339 = vpop.f32.mrf.mxu0
          %v2340 = vadd.f32 %v2228, %v2339
          %2341 = vmatmul.bf16.gmra.mxu0 %v2205
          %v2342 = vpop.f32.mrf.mxu0
          %v2343 = vadd.f32 %v2228, %v2342
          %v2344 = vpop.f32.mrf.mxu0
          %v2345 = vadd.f32 %v2228, %v2344
          %2346 = vmatmul.bf16.gmra.mxu0 %v2206
          %v2347 = vpop.f32.mrf.mxu0
          %v2348 = vadd.f32 %v2228, %v2347
          %v2349 = vpop.f32.mrf.mxu0
          %v2350 = vadd.f32 %v2228, %v2349
          %2351 = vmatmul.bf16.gmra.mxu0 %v2207
          %v2352 = vpop.f32.mrf.mxu0
          %v2353 = vadd.f32 %v2228, %v2352
          %v2354 = vpop.f32.mrf.mxu0
          %v2355 = vadd.f32 %v2228, %v2354
          %2356 = vmatmul.bf16.gmra.mxu0 %v2208
          %v2357 = vpop.f32.mrf.mxu0
          %v2358 = vadd.f32 %v2228, %v2357
          %v2359 = vpop.f32.mrf.mxu0
          %v2360 = vadd.f32 %v2228, %v2359
          %2361 = vmatmul.bf16.gmra.mxu0 %v2209
          %v2362 = vpop.f32.mrf.mxu0
          %v2363 = vadd.f32 %v2228, %v2362
          %v2364 = vpop.f32.mrf.mxu0
          %v2365 = vadd.f32 %v2228, %v2364
          %2366 = vdwg.mxu0
          %2367 = vst [vmem:[%s331] sm:$0xff] %v2288
          %2368 = vst [vmem:[%s331 + $0x8] sm:$0xff] %v2290
          %2369 = vst [vmem:[%s331 + $0x10] sm:$0xff] %v2293
          %2370 = vst [vmem:[%s331 + $0x18] sm:$0xff] %v2295
          %2371 = vst [vmem:[%s331 + $0x20] sm:$0xff] %v2298
          %2372 = vst [vmem:[%s331 + $0x28] sm:$0xff] %v2300
          %2373 = vst [vmem:[%s331 + $0x30] sm:$0xff] %v2303
          %2374 = vst [vmem:[%s331 + $0x38] sm:$0xff] %v2305
          %2375 = vst [vmem:[%s331 + $0x40] sm:$0xff] %v2308
          %2376 = vst [vmem:[%s331 + $0x48] sm:$0xff] %v2310
          %2377 = vst [vmem:[%s331 + $0x50] sm:$0xff] %v2313
          %2378 = vst [vmem:[%s331 + $0x58] sm:$0xff] %v2315
          %2379 = vst [vmem:[%s331 + $0x60] sm:$0xff] %v2318
          %2380 = vst [vmem:[%s331 + $0x68] sm:$0xff] %v2320
          %2381 = vst [vmem:[%s331 + $0x70] sm:$0xff] %v2323
          %2382 = vst [vmem:[%s331 + $0x78] sm:$0xff] %v2325
          %2383 = vst [vmem:[%s331 + $0x80] sm:$0xff] %v2328
          %2384 = vst [vmem:[%s331 + $0x88] sm:$0xff] %v2330
          %2385 = vst [vmem:[%s331 + $0x90] sm:$0xff] %v2333
          %2386 = vst [vmem:[%s331 + $0x98] sm:$0xff] %v2335
          %2387 = vst [vmem:[%s331 + $0xa0] sm:$0xff] %v2338
          %2388 = vst [vmem:[%s331 + $0xa8] sm:$0xff] %v2340
          %2389 = vst [vmem:[%s331 + $0xb0] sm:$0xff] %v2343
          %2390 = vst [vmem:[%s331 + $0xb8] sm:$0xff] %v2345
          %2391 = vst [vmem:[%s331 + $0xc0] sm:$0xff] %v2348
          %2392 = vst [vmem:[%s331 + $0xc8] sm:$0xff] %v2350
          %2393 = vst [vmem:[%s331 + $0xd0] sm:$0xff] %v2353
          %2394 = vst [vmem:[%s331 + $0xd8] sm:$0xff] %v2355
          %2395 = vst [vmem:[%s331 + $0xe0] sm:$0xff] %v2358
          %2396 = vst [vmem:[%s331 + $0xe8] sm:$0xff] %v2360
          %2397 = vst [vmem:[%s331 + $0xf0] sm:$0xff] %v2363
          %2398 = vst [vmem:[%s331 + $0xf8] sm:$0xff] %v2365
        $region60: #{tpu_custom_call.1} parent=47 // pred_fallthru
          _
        %s2399 = sand.u32 %s203, 1
        %s2400 = scalar_lea.sflag [#allocation5], %s2399
        %s2401 = sand.u32 %s203, 1
        %s2402 = smul.addr %s2401, 256
        %s2403 = scalar_lea.vmem [#allocation6], %s2402
        // Predicated region
        $region61: #{tpu_custom_call.1} parent=47 // pred_check
          %p2404 = pneg %p213
        $region62: #{tpu_custom_call.1} parent=47 // pred_check_branch
          %2406 = sbr.rel (%p2404) target = $region64
        $region63: #{tpu_custom_call.1} parent=47 // pred_region
          %s2407 = smul.u32 32, %s28
          %2409 = vsyncadd %s2400, 0
          %s2410 = smul.addr %s2407, 8
          %s2411 = scalar_lea.hbm %s7, %s2410
          %s2412 = sshll.u32 %s2403, 4
          %s2413 = int_to_ptr.vmem [resolvable:$true] %s2412
          %s2414 = sshll.u32 %s2411, 4
          %s2415 = int_to_ptr.hbm [resolvable:$true] %s2414
          %2420 = dma.vmem_to_hbm [thread:$0]  %s2413, 4096, %s2415, %s2400, 128, 128, 8
        $region64: #{tpu_custom_call.1} parent=47 // pred_fallthru
          _
      $region48: #{tpu_custom_call.1} parent=5 // pred_fallthru
        _
      %p2421 = scmp.le.s32.totalorder 2, %s19
      // Predicated region
      $region65: #{tpu_custom_call.1} parent=5 // pred_check
        %p2422 = pneg %p2421
      $region66: #{tpu_custom_call.1} parent=5 // pred_check_branch
        %2424 = sbr.rel (%p2422) target = $region68
      $region67: #{tpu_custom_call.1} parent=5 // pred_region
        %s2425 = ssub.s32 %s19, 2
        // Predicated region
        $region69: #{tpu_custom_call.1} parent=67 // pred_check
          %p2426 = pneg %p219
        $region70: #{tpu_custom_call.1} parent=67 // pred_check_branch
          %2428 = sbr.rel (%p2426) target = $region72
        $region71: #{tpu_custom_call.1} parent=67 // pred_region
          %s2429 = sand.u32 %s204, 1
          %s2430 = scalar_lea.sflag [#allocation5], %s2429
          %s2431 = sand.u32 %s204, 1
          %s2432 = smul.addr %s2431, 256
          %s2433 = scalar_lea.vmem [#allocation6], %s2432
          %2435 = dma.done %s2430, 4096
        $region72: #{tpu_custom_call.1} parent=67 // pred_fallthru
          _
      $region68: #{tpu_custom_call.1} parent=5 // pred_fallthru
        _
    $region6: #{tpu_custom_call.1} parent=1 // loop_footer
      %s23 = sadd.s32 1, %s19
    $region7: #{tpu_custom_call.1} parent=1 // loop_footer_branch
      %18 = sbr.rel target = $region3
    $region8: #{tpu_custom_call.1} parent=1 // loop_exit
      _
    %2436 = vsyncpa [#allocation4], 1
    %s2437 = scalar_lea.sflag [#allocation4], 1
    %2438 = vsyncpa %s2437, 1
    %2439 = vsyncpa [#allocation5], 1
    %s2440 = scalar_lea.sflag [#allocation5], 1
    %2441 = vsyncpa %s2440, 1

</llo_original>
